<compile_context>
chip_gen: v5e
topology: v5e:2x2
jax: 0.10.0
libtpu: 0.0.40
codegen_flags: <defaults>
</compile_context>

<pallas_src>
import functools

import jax
import jax.numpy as jnp
from jax.experimental import pallas as pl
from jax.experimental.pallas import tpu as pltpu


def _fused_decoder_kernel(*refs, cfg, batch, eps):
  """Fused DecoderCNN forward (all layers + final normalize in one kernel).

  refs = [x_ref, (Wcat_ref, gamma_ref, beta_ref) * n_layers, o_ref, buf_ref * n_layers]
    x_ref     : (N, C0, L0)        input exactly as the module sees it (NCL)
    Wcat_ref  : (K*Cin, Cout)      flipped per-tap ConvT weights, taps stacked on rows
    gamma/beta: (1, Cout)          BatchNorm affine params
    o_ref     : (N, Cf, Lf)        output written already in NCL
    buf_ref   : (N*L_out+K-1, Cin) per-layer zero-upsample/pad staging scratch (VMEM)
  Activations inside the kernel are channels-last 2-D slabs (N*L, C).
  TODO(synk): a channels-first (C on sublanes, spatial on lanes) layout would raise lane
  fill from ~32/128 and make BN lane-native, but the stride-2 spatial scatter becomes
  lane-strided; deferred while the kernel is launch-bound.
  """
  n_layers = len(cfg)
  x_ref = refs[0]
  o_ref = refs[1 + 3 * n_layers]
  buf_refs = refs[2 + 3 * n_layers:]
  N = batch

  act = None
  for li, (K, s, l_in, l_out, cin, cout) in enumerate(cfg):
    w_ref, g_ref, b_ref = refs[1 + 3 * li: 4 + 3 * li]
    buf = buf_refs[li]
    m_out = N * l_out

    # ---- zero-upsample + per-sample pad, written straight into VMEM scratch --------
    # Per-sample block: [K-1 zeros | x_0 0^(s-1) x_1 0^(s-1) ... x_{L-1}] of length
    # l_out, plus K-1 trailing zero rows after the last sample, so the K tap slices
    # below never mix samples.  (Replaces the old dense 0/1 U-matrix matmul.)
    buf[...] = jnp.zeros_like(buf)
    for n in range(N):
      base = n * l_out + (K - 1)
      if li == 0:
        # Fold the NCL -> NLC input transpose into the scatter (no wrapper glue).
        rows = jnp.transpose(x_ref[n])                     # (C0, L0) -> (L0, C0)
      else:
        rows = act[n * l_in:(n + 1) * l_in, :]
      if s == 1:
        buf[pl.ds(base, l_in), :] = rows
      else:
        # Strided sublane store: input row i lands at buffer row base + i*s.
        buf[pl.ds(base, l_in, stride=s), :] = rows
    # TODO(synk): polyphase (act @ Wcat on the m_in rows + strided scatter-adds) would
    # also skip the structural zero rows in the matmul below (~2x MXU FLOPs on the
    # stride-2 layers); not taken while the MXU has slack and to keep strided RMWs out
    # (v5e has a single vst slot).

    # ---- ConvTranspose1d: ONE matmul with a K*Cin-wide contraction ------------------
    # slab[:, k*Cin:(k+1)*Cin] = buf[k : k+m_out]; Wcat rows are the matching flipped
    # taps -> much better MXU fill than K tiny Cin-wide matmuls.
    slab = jnp.concatenate([buf[pl.ds(k, m_out), :] for k in range(K)], axis=1)
    acc = jnp.dot(slab, w_ref[...], preferred_element_type=jnp.float32)
    # NOTE: conv bias omitted on purpose - cancelled exactly by batch-stat BN below.
    # Default MXU f32 precision (~1e-6) is fine here; pass precision=HIGHEST if
    # bit-level parity with PyTorch f32 conv is ever required.
    # TODO(synk): at MXU-bound sizes, cast slab/Wcat to bf16 (keep f32 accumulation).

    # ---- BatchNorm1d (training-mode batch stats), folded to scale/shift -------------
    # Per-channel sums on the MXU (ones-row matmuls) instead of cross-sublane (XLU)
    # reductions; biased variance, matching the BN forward normalization.
    ones_m = jnp.full((1, m_out), 1.0 / m_out, jnp.float32)
    mean = jnp.dot(ones_m, acc, preferred_element_type=jnp.float32)          # (1, Cout)
    mean_sq = jnp.dot(ones_m, acc * acc, preferred_element_type=jnp.float32)
    var = jnp.maximum(mean_sq - mean * mean, 0.0)
    scale = g_ref[...] * jax.lax.rsqrt(var + eps)
    shift = b_ref[...] - mean * scale
    y = acc * scale + shift
    if li < n_layers - 1:                      # ReLU on every layer except the last
      y = jnp.maximum(y, 0.0)
    act = y
    # TODO(synk): eval-mode BN (running stats) would need those buffers as operands and
    # would re-introduce the conv bias; this kernel matches forward() in train() mode.

  # ---- F.normalize(out, dim=1): per-(sample, position) L2 over channels (eps=1e-12).
  nsq = jnp.sum(act * act, axis=1, keepdims=True)
  act = act * jax.lax.rsqrt(jnp.maximum(nsq, 1e-24))

  # ---- Write the output already in NCL (NLC -> NCL transpose folded into the store).
  l_f = cfg[-1][3]
  for n in range(N):
    o_ref[n] = jnp.transpose(act[n * l_f:(n + 1) * l_f, :])   # (Lf, Cf) -> (Cf, Lf)


def prepare_decoder(params, batch, in_len):
  """Host-side weight/shape prep. Call ONCE and reuse (hoisted out of the hot path)."""
  operands = []
  cfg = []
  length = in_len
  for p in params:
    cin, cout, k = p["w"].shape
    s = int(p["stride"])
    l_out = (length - 1) * s + k
    # Flipped taps stacked along rows: Wcat[t*Cin + ci, co] = w[ci, co, K-1-t].
    w_cat = jnp.transpose(jnp.flip(p["w"], axis=2), (2, 0, 1)).reshape(k * cin, cout)
    operands += [w_cat, p["gamma"].reshape(1, cout), p["beta"].reshape(1, cout)]
    # p["b"] (conv bias) intentionally not passed: cancelled by batch-stat BN.
    cfg.append((k, s, length, l_out, cin, cout))
    length = l_out
  return operands, tuple(cfg), length


def _decoder_forward_impl(x, *operands, cfg, batch):
  c_final, l_final = cfg[-1][5], cfg[-1][3]
  kernel = functools.partial(_fused_decoder_kernel, cfg=cfg, batch=batch, eps=1e-5)
  # Per-layer staging scratch for the zero-upsampled/padded input (VMEM-only).
  scratch = [pltpu.VMEM((batch * l_out + k - 1, cin), jnp.float32)
             for (k, s, l_in, l_out, cin, cout) in cfg]
  # Whole problem (<1 MiB operands + activations + scratch) fits VMEM on v5e/v6e/v7x,
  # so a single ungridded invocation is used; only x and the final output touch HBM.
  # TODO(synk): once N*L grows, add a row-dim grid with dimension_semantics=("parallel",)
  # (two-pass / cross-tile BN stats) so both v7x TensorCores are used, and set
  # pltpu.CompilerParams(vmem_limit_bytes=...) explicitly for v7x's 64 MiB VMEM.
  return pl.pallas_call(
      kernel,
      out_shape=jax.ShapeDtypeStruct((batch, c_final, l_final), jnp.float32),
      in_specs=[pl.BlockSpec(memory_space=pltpu.MemorySpace.VMEM)] * (1 + len(operands)),
      out_specs=pl.BlockSpec(memory_space=pltpu.MemorySpace.VMEM),
      scratch_shapes=scratch,
  )(x, *operands)


def make_decoder_forward(params, batch, in_len):
  """Build the decoder: returns (jitted forward taking (x, *operands), operands, L_out)."""
  operands, cfg, l_final = prepare_decoder(params, batch, in_len)
  fwd = jax.jit(functools.partial(_decoder_forward_impl, cfg=cfg, batch=batch))
  return fwd, operands, l_final


def make_params(key, embed_size, filter_size, stride, filter_nums, final_filter_size):
  """Deterministic (xavier-normal-style) parameter init matching the module's layers."""
  cfgs = []
  # layer 0: ConvT(filter_nums[-1] -> filter_nums[-2], final_filter_size, stride=1)
  cfgs.append((filter_nums[-1], filter_nums[-2], final_filter_size, 1))
  # middle layers
  for i, _ in enumerate(filter_nums[1:-1]):
    cfgs.append((filter_nums[-(i + 2)], filter_nums[-(i + 3)], filter_size, stride))
  # last layer: ConvT(filter_nums[0] -> embed_size, filter_size, stride) + BN (no ReLU)
  cfgs.append((filter_nums[0], embed_size, filter_size, stride))

  params = []
  for (cin, cout, k, s) in cfgs:
    key, kw, kb = jax.random.split(key, 3)
    std = (2.0 / ((cin + cout) * k)) ** 0.5
    w = std * jax.random.normal(kw, (cin, cout, k), jnp.float32)   # PyTorch ConvT layout
    # Bias kept for interface parity; mathematically cancelled by batch-stat BN and
    # therefore not fed to the kernel.
    b = 0.01 * jax.random.normal(kb, (cout,), jnp.float32)
    gamma = jnp.ones((cout,), jnp.float32)                         # BN default init
    beta = jnp.zeros((cout,), jnp.float32)
    params.append(dict(w=w, b=b, gamma=gamma, beta=beta, stride=s))
  return params


if __name__ == "__main__":
  key = jax.random.PRNGKey(0)

  embed_size = 32
  filter_size = 3
  stride = 2
  filter_nums = [8, 16, 32]
  final_filter_size = 5
  N, L = 2, 8

  key, kp, kx = jax.random.split(key, 3)
  params = make_params(kp, embed_size, filter_size, stride, filter_nums, final_filter_size)
  x = jax.random.normal(kx, (N, filter_nums[-1], L), jnp.float32)   # NCL, like PyTorch

  fwd, operands, l_final = make_decoder_forward(params, N, L)       # host prep runs ONCE
  out = jax.block_until_ready(fwd(x, *operands))                    # hot path: pallas_call only

  # Expected length: 8 -(k=5,s=1)-> 12 -(k=3,s=2)-> 25 -(k=3,s=2)-> 51
  assert out.shape == (N, embed_size, 51), out.shape
  # Final output is L2-normalized along the channel axis.
  chan_norms = jnp.sqrt(jnp.sum(out * out, axis=1))
  assert bool(jnp.all(jnp.isfinite(out)))
  assert bool(jnp.allclose(chan_norms, 1.0, atol=1e-4))

  print("KERNEL_OK")
</pallas_src>

<mosaic_0001>
module attributes {stable_mosaic.version = 11 : i64} {
  func.func @_fused_decoder_kernel(%arg0: memref<2x32x8xf32, #tpu.memory_space<vmem>>, %arg1: memref<160x16xf32, #tpu.memory_space<vmem>>, %arg2: memref<1x16xf32, #tpu.memory_space<vmem>>, %arg3: memref<1x16xf32, #tpu.memory_space<vmem>>, %arg4: memref<48x8xf32, #tpu.memory_space<vmem>>, %arg5: memref<1x8xf32, #tpu.memory_space<vmem>>, %arg6: memref<1x8xf32, #tpu.memory_space<vmem>>, %arg7: memref<24x32xf32, #tpu.memory_space<vmem>>, %arg8: memref<1x32xf32, #tpu.memory_space<vmem>>, %arg9: memref<1x32xf32, #tpu.memory_space<vmem>>, %arg10: memref<2x32x51xf32, #tpu.memory_space<vmem>>, %arg11: memref<28x32xf32, #tpu.memory_space<vmem>>, %arg12: memref<52x16xf32, #tpu.memory_space<vmem>>, %arg13: memref<104x8xf32, #tpu.memory_space<vmem>>) attributes {dimension_semantics = [], scalar_prefetch = 0 : i64, scratch_operands = 3 : i64, tpu.core_type = #tpu.core_type<tc>} {
    %cst = arith.constant 0.000000e+00 : f32
    %0 = vector.broadcast %cst : f32 to vector<28x32xf32>
    %c0 = arith.constant 0 : index
    %c0_0 = arith.constant 0 : index
    %1 = vector.load %arg11[%c0, %c0_0] : memref<28x32xf32, #tpu.memory_space<vmem>>, vector<28x32xf32>
    tpu.vector_store %arg11[%c0, %c0_0], %0 {strides = array<i32>} : memref<28x32xf32, #tpu.memory_space<vmem>>, vector<28x32xf32>,
    %c0_1 = arith.constant 0 : index
    %c0_2 = arith.constant 0 : index
    %c0_3 = arith.constant 0 : index
    %2 = vector.load %arg0[%c0_1, %c0_2, %c0_3] : memref<2x32x8xf32, #tpu.memory_space<vmem>>, vector<1x32x8xf32>
    %3 = vector.shape_cast %2 : vector<1x32x8xf32> to vector<32x8xf32>
    %4 = tpu.transpose %3, [1, 0] : vector<32x8xf32> -> vector<8x32xf32>
    %c4 = arith.constant 4 : index
    %c0_4 = arith.constant 0 : index
    %5 = vector.load %arg11[%c4, %c0_4] : memref<28x32xf32, #tpu.memory_space<vmem>>, vector<8x32xf32>
    tpu.vector_store %arg11[%c4, %c0_4], %4 {strides = array<i32>} : memref<28x32xf32, #tpu.memory_space<vmem>>, vector<8x32xf32>,
    %c1 = arith.constant 1 : index
    %c0_5 = arith.constant 0 : index
    %c0_6 = arith.constant 0 : index
    %6 = vector.load %arg0[%c1, %c0_5, %c0_6] : memref<2x32x8xf32, #tpu.memory_space<vmem>>, vector<1x32x8xf32>
    %7 = vector.shape_cast %6 : vector<1x32x8xf32> to vector<32x8xf32>
    %8 = tpu.transpose %7, [1, 0] : vector<32x8xf32> -> vector<8x32xf32>
    %c16 = arith.constant 16 : index
    %c0_7 = arith.constant 0 : index
    %9 = vector.load %arg11[%c16, %c0_7] : memref<28x32xf32, #tpu.memory_space<vmem>>, vector<8x32xf32>
    tpu.vector_store %arg11[%c16, %c0_7], %8 {strides = array<i32>} : memref<28x32xf32, #tpu.memory_space<vmem>>, vector<8x32xf32>,
    %c0_8 = arith.constant 0 : index
    %c0_9 = arith.constant 0 : index
    %10 = vector.load %arg11[%c0_8, %c0_9] : memref<28x32xf32, #tpu.memory_space<vmem>>, vector<24x32xf32>
    %c1_10 = arith.constant 1 : index
    %c0_11 = arith.constant 0 : index
    %11 = vector.load %arg11[%c1_10, %c0_11] : memref<28x32xf32, #tpu.memory_space<vmem>>, vector<24x32xf32>
    %c2 = arith.constant 2 : index
    %c0_12 = arith.constant 0 : index
    %12 = vector.load %arg11[%c2, %c0_12] : memref<28x32xf32, #tpu.memory_space<vmem>>, vector<24x32xf32>
    %c3 = arith.constant 3 : index
    %c0_13 = arith.constant 0 : index
    %13 = vector.load %arg11[%c3, %c0_13] : memref<28x32xf32, #tpu.memory_space<vmem>>, vector<24x32xf32>
    %c4_14 = arith.constant 4 : index
    %c0_15 = arith.constant 0 : index
    %14 = vector.load %arg11[%c4_14, %c0_15] : memref<28x32xf32, #tpu.memory_space<vmem>>, vector<24x32xf32>
    %15 = tpu.concatenate %10, %11, %12, %13, %14 in 1 : vector<24x32xf32>, vector<24x32xf32>, vector<24x32xf32>, vector<24x32xf32>, vector<24x32xf32> -> vector<24x160xf32>
    %c0_16 = arith.constant 0 : index
    %c0_17 = arith.constant 0 : index
    %16 = vector.load %arg1[%c0_16, %c0_17] : memref<160x16xf32, #tpu.memory_space<vmem>>, vector<160x16xf32>
    %cst_18 = arith.constant dense<0.000000e+00> : vector<24x16xf32>
    %17 = tpu.matmul %15, %16, %cst_18 {dimension_numbers = #tpu.dot_dimension_numbers<[1], [0], [0], [1], [0, 0, 1, 1], [], []>} : vector<24x160xf32>, vector<160x16xf32>, vector<24x16xf32> -> vector<24x16xf32>
    %cst_19 = arith.constant 0.0416666679 : f32
    %18 = vector.broadcast %cst_19 : f32 to vector<1x24xf32>
    %cst_20 = arith.constant dense<0.000000e+00> : vector<1x16xf32>
    %19 = tpu.matmul %18, %17, %cst_20 {dimension_numbers = #tpu.dot_dimension_numbers<[1], [0], [0], [1], [0, 0, 1, 1], [], []>} : vector<1x24xf32>, vector<24x16xf32>, vector<1x16xf32> -> vector<1x16xf32>
    %20 = arith.mulf %17, %17 : vector<24x16xf32>
    %cst_21 = arith.constant dense<0.000000e+00> : vector<1x16xf32>
    %21 = tpu.matmul %18, %20, %cst_21 {dimension_numbers = #tpu.dot_dimension_numbers<[1], [0], [0], [1], [0, 0, 1, 1], [], []>} : vector<1x24xf32>, vector<24x16xf32>, vector<1x16xf32> -> vector<1x16xf32>
    %22 = arith.mulf %19, %19 : vector<1x16xf32>
    %23 = arith.subf %21, %22 : vector<1x16xf32>
    %cst_22 = arith.constant 0.000000e+00 : f32
    %24 = vector.broadcast %cst_22 : f32 to vector<1x16xf32>
    %25 = arith.maximumf %23, %24 : vector<1x16xf32>
    %c0_23 = arith.constant 0 : index
    %c0_24 = arith.constant 0 : index
    %26 = vector.load %arg2[%c0_23, %c0_24] : memref<1x16xf32, #tpu.memory_space<vmem>>, vector<1x16xf32>
    %cst_25 = arith.constant 9.99999974E-6 : f32
    %27 = vector.broadcast %cst_25 : f32 to vector<1x16xf32>
    %28 = arith.addf %25, %27 : vector<1x16xf32>
    %29 = math.rsqrt %28 : vector<1x16xf32>
    %30 = arith.mulf %26, %29 : vector<1x16xf32>
    %c0_26 = arith.constant 0 : index
    %c0_27 = arith.constant 0 : index
    %31 = vector.load %arg3[%c0_26, %c0_27] : memref<1x16xf32, #tpu.memory_space<vmem>>, vector<1x16xf32>
    %32 = arith.mulf %19, %30 : vector<1x16xf32>
    %33 = arith.subf %31, %32 : vector<1x16xf32>
    %34 = vector.broadcast %30 : vector<1x16xf32> to vector<24x16xf32>
    %35 = arith.mulf %17, %34 : vector<24x16xf32>
    %36 = vector.broadcast %33 : vector<1x16xf32> to vector<24x16xf32>
    %37 = arith.addf %35, %36 : vector<24x16xf32>
    %cst_28 = arith.constant 0.000000e+00 : f32
    %38 = vector.broadcast %cst_28 : f32 to vector<24x16xf32>
    %39 = arith.maximumf %37, %38 : vector<24x16xf32>
    %cst_29 = arith.constant 0.000000e+00 : f32
    %40 = vector.broadcast %cst_29 : f32 to vector<52x16xf32>
    %c0_30 = arith.constant 0 : index
    %c0_31 = arith.constant 0 : index
    %41 = vector.load %arg12[%c0_30, %c0_31] : memref<52x16xf32, #tpu.memory_space<vmem>>, vector<52x16xf32>
    tpu.vector_store %arg12[%c0_30, %c0_31], %40 {strides = array<i32>} : memref<52x16xf32, #tpu.memory_space<vmem>>, vector<52x16xf32>,
    %42 = vector.extract_strided_slice %39 {offsets = [0, 0], sizes = [12, 16], strides = [1, 1]} : vector<24x16xf32> to vector<12x16xf32>
    %c2_32 = arith.constant 2 : index
    %c0_33 = arith.constant 0 : index
    %43 = tpu.strided_load %arg12[%c2_32, %c0_33] {strides = array<i32: 2, 1>} : memref<52x16xf32, #tpu.memory_space<vmem>>, vector<12x16xf32>
    tpu.strided_store %arg12[%c2_32, %c0_33], %42 {strides = array<i32: 2, 1>} : memref<52x16xf32, #tpu.memory_space<vmem>>, vector<12x16xf32>
    %44 = vector.extract_strided_slice %39 {offsets = [12, 0], sizes = [12, 16], strides = [1, 1]} : vector<24x16xf32> to vector<12x16xf32>
    %c27 = arith.constant 27 : index
    %c0_34 = arith.constant 0 : index
    %45 = tpu.strided_load %arg12[%c27, %c0_34] {strides = array<i32: 2, 1>} : memref<52x16xf32, #tpu.memory_space<vmem>>, vector<12x16xf32>
    tpu.strided_store %arg12[%c27, %c0_34], %44 {strides = array<i32: 2, 1>} : memref<52x16xf32, #tpu.memory_space<vmem>>, vector<12x16xf32>
    %c0_35 = arith.constant 0 : index
    %c0_36 = arith.constant 0 : index
    %46 = vector.load %arg12[%c0_35, %c0_36] : memref<52x16xf32, #tpu.memory_space<vmem>>, vector<50x16xf32>
    %c1_37 = arith.constant 1 : index
    %c0_38 = arith.constant 0 : index
    %47 = vector.load %arg12[%c1_37, %c0_38] : memref<52x16xf32, #tpu.memory_space<vmem>>, vector<50x16xf32>
    %c2_39 = arith.constant 2 : index
    %c0_40 = arith.constant 0 : index
    %48 = vector.load %arg12[%c2_39, %c0_40] : memref<52x16xf32, #tpu.memory_space<vmem>>, vector<50x16xf32>
    %49 = tpu.concatenate %46, %47, %48 in 1 : vector<50x16xf32>, vector<50x16xf32>, vector<50x16xf32> -> vector<50x48xf32>
    %c0_41 = arith.constant 0 : index
    %c0_42 = arith.constant 0 : index
    %50 = vector.load %arg4[%c0_41, %c0_42] : memref<48x8xf32, #tpu.memory_space<vmem>>, vector<48x8xf32>
    %cst_43 = arith.constant dense<0.000000e+00> : vector<50x8xf32>
    %51 = tpu.matmul %49, %50, %cst_43 {dimension_numbers = #tpu.dot_dimension_numbers<[1], [0], [0], [1], [0, 0, 1, 1], [], []>} : vector<50x48xf32>, vector<48x8xf32>, vector<50x8xf32> -> vector<50x8xf32>
    %cst_44 = arith.constant 2.000000e-02 : f32
    %52 = vector.broadcast %cst_44 : f32 to vector<1x50xf32>
    %cst_45 = arith.constant dense<0.000000e+00> : vector<1x8xf32>
    %53 = tpu.matmul %52, %51, %cst_45 {dimension_numbers = #tpu.dot_dimension_numbers<[1], [0], [0], [1], [0, 0, 1, 1], [], []>} : vector<1x50xf32>, vector<50x8xf32>, vector<1x8xf32> -> vector<1x8xf32>
    %54 = arith.mulf %51, %51 : vector<50x8xf32>
    %cst_46 = arith.constant dense<0.000000e+00> : vector<1x8xf32>
    %55 = tpu.matmul %52, %54, %cst_46 {dimension_numbers = #tpu.dot_dimension_numbers<[1], [0], [0], [1], [0, 0, 1, 1], [], []>} : vector<1x50xf32>, vector<50x8xf32>, vector<1x8xf32> -> vector<1x8xf32>
    %56 = arith.mulf %53, %53 : vector<1x8xf32>
    %57 = arith.subf %55, %56 : vector<1x8xf32>
    %cst_47 = arith.constant 0.000000e+00 : f32
    %58 = vector.broadcast %cst_47 : f32 to vector<1x8xf32>
    %59 = arith.maximumf %57, %58 : vector<1x8xf32>
    %c0_48 = arith.constant 0 : index
    %c0_49 = arith.constant 0 : index
    %60 = vector.load %arg5[%c0_48, %c0_49] : memref<1x8xf32, #tpu.memory_space<vmem>>, vector<1x8xf32>
    %cst_50 = arith.constant 9.99999974E-6 : f32
    %61 = vector.broadcast %cst_50 : f32 to vector<1x8xf32>
    %62 = arith.addf %59, %61 : vector<1x8xf32>
    %63 = math.rsqrt %62 : vector<1x8xf32>
    %64 = arith.mulf %60, %63 : vector<1x8xf32>
    %c0_51 = arith.constant 0 : index
    %c0_52 = arith.constant 0 : index
    %65 = vector.load %arg6[%c0_51, %c0_52] : memref<1x8xf32, #tpu.memory_space<vmem>>, vector<1x8xf32>
    %66 = arith.mulf %53, %64 : vector<1x8xf32>
    %67 = arith.subf %65, %66 : vector<1x8xf32>
    %68 = vector.broadcast %64 : vector<1x8xf32> to vector<50x8xf32>
    %69 = arith.mulf %51, %68 : vector<50x8xf32>
    %70 = vector.broadcast %67 : vector<1x8xf32> to vector<50x8xf32>
    %71 = arith.addf %69, %70 : vector<50x8xf32>
    %cst_53 = arith.constant 0.000000e+00 : f32
    %72 = vector.broadcast %cst_53 : f32 to vector<50x8xf32>
    %73 = arith.maximumf %71, %72 : vector<50x8xf32>
    %cst_54 = arith.constant 0.000000e+00 : f32
    %74 = vector.broadcast %cst_54 : f32 to vector<104x8xf32>
    %c0_55 = arith.constant 0 : index
    %c0_56 = arith.constant 0 : index
    %75 = vector.load %arg13[%c0_55, %c0_56] : memref<104x8xf32, #tpu.memory_space<vmem>>, vector<104x8xf32>
    tpu.vector_store %arg13[%c0_55, %c0_56], %74 {strides = array<i32>} : memref<104x8xf32, #tpu.memory_space<vmem>>, vector<104x8xf32>,
    %76 = vector.extract_strided_slice %73 {offsets = [0, 0], sizes = [25, 8], strides = [1, 1]} : vector<50x8xf32> to vector<25x8xf32>
    %c2_57 = arith.constant 2 : index
    %c0_58 = arith.constant 0 : index
    %77 = tpu.strided_load %arg13[%c2_57, %c0_58] {strides = array<i32: 2, 1>} : memref<104x8xf32, #tpu.memory_space<vmem>>, vector<25x8xf32>
    tpu.strided_store %arg13[%c2_57, %c0_58], %76 {strides = array<i32: 2, 1>} : memref<104x8xf32, #tpu.memory_space<vmem>>, vector<25x8xf32>
    %78 = vector.extract_strided_slice %73 {offsets = [25, 0], sizes = [25, 8], strides = [1, 1]} : vector<50x8xf32> to vector<25x8xf32>
    %c53 = arith.constant 53 : index
    %c0_59 = arith.constant 0 : index
    %79 = tpu.strided_load %arg13[%c53, %c0_59] {strides = array<i32: 2, 1>} : memref<104x8xf32, #tpu.memory_space<vmem>>, vector<25x8xf32>
    tpu.strided_store %arg13[%c53, %c0_59], %78 {strides = array<i32: 2, 1>} : memref<104x8xf32, #tpu.memory_space<vmem>>, vector<25x8xf32>
    %c0_60 = arith.constant 0 : index
    %c0_61 = arith.constant 0 : index
    %80 = vector.load %arg13[%c0_60, %c0_61] : memref<104x8xf32, #tpu.memory_space<vmem>>, vector<102x8xf32>
    %c1_62 = arith.constant 1 : index
    %c0_63 = arith.constant 0 : index
    %81 = vector.load %arg13[%c1_62, %c0_63] : memref<104x8xf32, #tpu.memory_space<vmem>>, vector<102x8xf32>
    %c2_64 = arith.constant 2 : index
    %c0_65 = arith.constant 0 : index
    %82 = vector.load %arg13[%c2_64, %c0_65] : memref<104x8xf32, #tpu.memory_space<vmem>>, vector<102x8xf32>
    %83 = tpu.concatenate %80, %81, %82 in 1 : vector<102x8xf32>, vector<102x8xf32>, vector<102x8xf32> -> vector<102x24xf32>
    %c0_66 = arith.constant 0 : index
    %c0_67 = arith.constant 0 : index
    %84 = vector.load %arg7[%c0_66, %c0_67] : memref<24x32xf32, #tpu.memory_space<vmem>>, vector<24x32xf32>
    %cst_68 = arith.constant dense<0.000000e+00> : vector<102x32xf32>
    %85 = tpu.matmul %83, %84, %cst_68 {dimension_numbers = #tpu.dot_dimension_numbers<[1], [0], [0], [1], [0, 0, 1, 1], [], []>} : vector<102x24xf32>, vector<24x32xf32>, vector<102x32xf32> -> vector<102x32xf32>
    %cst_69 = arith.constant 0.00980392192 : f32
    %86 = vector.broadcast %cst_69 : f32 to vector<1x102xf32>
    %cst_70 = arith.constant dense<0.000000e+00> : vector<1x32xf32>
    %87 = tpu.matmul %86, %85, %cst_70 {dimension_numbers = #tpu.dot_dimension_numbers<[1], [0], [0], [1], [0, 0, 1, 1], [], []>} : vector<1x102xf32>, vector<102x32xf32>, vector<1x32xf32> -> vector<1x32xf32>
    %88 = arith.mulf %85, %85 : vector<102x32xf32>
    %cst_71 = arith.constant dense<0.000000e+00> : vector<1x32xf32>
    %89 = tpu.matmul %86, %88, %cst_71 {dimension_numbers = #tpu.dot_dimension_numbers<[1], [0], [0], [1], [0, 0, 1, 1], [], []>} : vector<1x102xf32>, vector<102x32xf32>, vector<1x32xf32> -> vector<1x32xf32>
    %90 = arith.mulf %87, %87 : vector<1x32xf32>
    %91 = arith.subf %89, %90 : vector<1x32xf32>
    %cst_72 = arith.constant 0.000000e+00 : f32
    %92 = vector.broadcast %cst_72 : f32 to vector<1x32xf32>
    %93 = arith.maximumf %91, %92 : vector<1x32xf32>
    %c0_73 = arith.constant 0 : index
    %c0_74 = arith.constant 0 : index
    %94 = vector.load %arg8[%c0_73, %c0_74] : memref<1x32xf32, #tpu.memory_space<vmem>>, vector<1x32xf32>
    %cst_75 = arith.constant 9.99999974E-6 : f32
    %95 = vector.broadcast %cst_75 : f32 to vector<1x32xf32>
    %96 = arith.addf %93, %95 : vector<1x32xf32>
    %97 = math.rsqrt %96 : vector<1x32xf32>
    %98 = arith.mulf %94, %97 : vector<1x32xf32>
    %c0_76 = arith.constant 0 : index
    %c0_77 = arith.constant 0 : index
    %99 = vector.load %arg9[%c0_76, %c0_77] : memref<1x32xf32, #tpu.memory_space<vmem>>, vector<1x32xf32>
    %100 = arith.mulf %87, %98 : vector<1x32xf32>
    %101 = arith.subf %99, %100 : vector<1x32xf32>
    %102 = vector.broadcast %98 : vector<1x32xf32> to vector<102x32xf32>
    %103 = arith.mulf %85, %102 : vector<102x32xf32>
    %104 = vector.broadcast %101 : vector<1x32xf32> to vector<102x32xf32>
    %105 = arith.addf %103, %104 : vector<102x32xf32>
    %106 = arith.mulf %105, %105 : vector<102x32xf32>
    %cst_78 = arith.constant dense<0.000000e+00> : vector<102xf32>
    %107 = vector.multi_reduction <add>, %106, %cst_78 [1] : vector<102x32xf32> to vector<102xf32>
    %108 = vector.shape_cast %107 : vector<102xf32> to vector<102x1xf32>
    %cst_79 = arith.constant 1.000000e-24 : f32
    %109 = vector.broadcast %cst_79 : f32 to vector<102x1xf32>
    %110 = arith.maximumf %108, %109 : vector<102x1xf32>
    %111 = math.rsqrt %110 : vector<102x1xf32>
    %112 = vector.broadcast %111 : vector<102x1xf32> to vector<102x32xf32>
    %113 = arith.mulf %105, %112 : vector<102x32xf32>
    %114 = vector.extract_strided_slice %113 {offsets = [0, 0], sizes = [51, 32], strides = [1, 1]} : vector<102x32xf32> to vector<51x32xf32>
    %115 = tpu.transpose %114, [1, 0] : vector<51x32xf32> -> vector<32x51xf32>
    %c0_80 = arith.constant 0 : index
    %c0_81 = arith.constant 0 : index
    %c0_82 = arith.constant 0 : index
    %116 = vector.load %arg10[%c0_80, %c0_81, %c0_82] : memref<2x32x51xf32, #tpu.memory_space<vmem>>, vector<1x32x51xf32>
    %117 = vector.shape_cast %116 : vector<1x32x51xf32> to vector<32x51xf32>
    %118 = vector.shape_cast %115 : vector<32x51xf32> to vector<1x32x51xf32>
    tpu.vector_store %arg10[%c0_80, %c0_81, %c0_82], %118 {strides = array<i32>} : memref<2x32x51xf32, #tpu.memory_space<vmem>>, vector<1x32x51xf32>,
    %119 = vector.extract_strided_slice %113 {offsets = [51, 0], sizes = [51, 32], strides = [1, 1]} : vector<102x32xf32> to vector<51x32xf32>
    %120 = tpu.transpose %119, [1, 0] : vector<51x32xf32> -> vector<32x51xf32>
    %c1_83 = arith.constant 1 : index
    %c0_84 = arith.constant 0 : index
    %c0_85 = arith.constant 0 : index
    %121 = vector.load %arg10[%c1_83, %c0_84, %c0_85] : memref<2x32x51xf32, #tpu.memory_space<vmem>>, vector<1x32x51xf32>
    %122 = vector.shape_cast %121 : vector<1x32x51xf32> to vector<32x51xf32>
    %123 = vector.shape_cast %120 : vector<32x51xf32> to vector<1x32x51xf32>
    tpu.vector_store %arg10[%c1_83, %c0_84, %c0_85], %123 {strides = array<i32>} : memref<2x32x51xf32, #tpu.memory_space<vmem>>, vector<1x32x51xf32>,
    return
  }
}

</mosaic_0001>

<llo_original>
// kernel: _decoder_forward_impl.1
$region0: #{_decoder_forward_impl.1}
  #allocation0 [shape = 'u32[]', space=smem, size = 0x4, offset = 0x4, fixed_abs, tag = 'smem constant byte address 0x4 - core index']
  #allocation1 [shape = 'u32[72,128]{1,0:T(1,128)}', space=vmem, size = 0x9000, scoped, tag = 'internal scratch']
  #allocation2 [shape = 'f32[28,32]{1,0:T(8,128)}', space=vmem, size = 0x4000, scoped, tag = 'scratch operand']
  #allocation3 [shape = 'f32[52,16]{1,0:T(8,128)}', space=vmem, size = 0x7000, scoped, tag = 'scratch operand']
  #allocation4 [shape = 'f32[104,8]{1,0:T(8,128)}', space=vmem, size = 0xd000, scoped, tag = 'scratch operand']
  %s0 = inlined_call_operand.vmem [shape: f32[2,32,8], index: 0, kind: input, shape index: {}]
  %s1 = inlined_call_operand.vmem [shape: f32[160,16], index: 1, kind: input, shape index: {}]
  %s2 = inlined_call_operand.vmem [shape: f32[1,16], index: 2, kind: input, shape index: {}]
  %s3 = inlined_call_operand.vmem [shape: f32[1,16], index: 3, kind: input, shape index: {}]
  %s4 = inlined_call_operand.vmem [shape: f32[48,8], index: 4, kind: input, shape index: {}]
  %s5 = inlined_call_operand.vmem [shape: f32[1,8], index: 5, kind: input, shape index: {}]
  %s6 = inlined_call_operand.vmem [shape: f32[1,8], index: 6, kind: input, shape index: {}]
  %s7 = inlined_call_operand.vmem [shape: f32[24,32], index: 7, kind: input, shape index: {}]
  %s8 = inlined_call_operand.vmem [shape: f32[1,32], index: 8, kind: input, shape index: {}]
  %s9 = inlined_call_operand.vmem [shape: f32[1,32], index: 9, kind: input, shape index: {}]
  %s10 = inlined_call_operand.hbm [shape: f32[2,32,51], index: 10, kind: output, shape index: {}]
  %s11 = sld [smem:[#allocation0]]
  $region50: #{_decoder_forward_impl.1} parent=0
    _
  %s13 = ssub.s32 1, %s11
  %s14 = scalar_select 0, %s13, %s11
  $region1: #{_decoder_forward_impl.1} parent=0
    #allocation5 [shape = 'u8[32768]{0}', space=vmem, size = 0x8000, scoped, tag = 'output window, operand 0, single buffered']
    #allocation6 [shape = 's32[1]{0}', space=sflag, size = 0x4, scoped, tag = 'scoped memory for _decoder_forward_impl.1']
    %15 = vsyncpa [#allocation6], 0
    // Predicated region
    $region2: #{_decoder_forward_impl.1} parent=1 // pred_check
      _
    $region3: #{_decoder_forward_impl.1} parent=1 // pred_check_branch
      %17 = sbr.rel (0) target = $region5
    $region4: #{_decoder_forward_impl.1} parent=1 // pred_region
      _
    $region5: #{_decoder_forward_impl.1} parent=1 // pred_fallthru
      _
    // Predicated region
    $region6: #{_decoder_forward_impl.1} parent=1 // pred_check
      _
    $region7: #{_decoder_forward_impl.1} parent=1 // pred_check_branch
      %19 = sbr.rel (0) target = $region9
    $region8: #{_decoder_forward_impl.1} parent=1 // pred_region
      _
    $region9: #{_decoder_forward_impl.1} parent=1 // pred_fallthru
      _
    // Predicated region
    $region10: #{_decoder_forward_impl.1} parent=1 // pred_check
      _
    $region11: #{_decoder_forward_impl.1} parent=1 // pred_check_branch
      %21 = sbr.rel (0) target = $region13
    $region12: #{_decoder_forward_impl.1} parent=1 // pred_region
      _
    $region13: #{_decoder_forward_impl.1} parent=1 // pred_fallthru
      _
    // Predicated region
    $region14: #{_decoder_forward_impl.1} parent=1 // pred_check
      _
    $region15: #{_decoder_forward_impl.1} parent=1 // pred_check_branch
      %23 = sbr.rel (0) target = $region17
    $region16: #{_decoder_forward_impl.1} parent=1 // pred_region
      _
    $region17: #{_decoder_forward_impl.1} parent=1 // pred_fallthru
      _
    // Predicated region
    $region18: #{_decoder_forward_impl.1} parent=1 // pred_check
      _
    $region19: #{_decoder_forward_impl.1} parent=1 // pred_check_branch
      %25 = sbr.rel (0) target = $region21
    $region20: #{_decoder_forward_impl.1} parent=1 // pred_region
      _
    $region21: #{_decoder_forward_impl.1} parent=1 // pred_fallthru
      _
    // Predicated region
    $region22: #{_decoder_forward_impl.1} parent=1 // pred_check
      _
    $region23: #{_decoder_forward_impl.1} parent=1 // pred_check_branch
      %27 = sbr.rel (0) target = $region25
    $region24: #{_decoder_forward_impl.1} parent=1 // pred_region
      _
    $region25: #{_decoder_forward_impl.1} parent=1 // pred_fallthru
      _
    // Predicated region
    $region26: #{_decoder_forward_impl.1} parent=1 // pred_check
      _
    $region27: #{_decoder_forward_impl.1} parent=1 // pred_check_branch
      %29 = sbr.rel (0) target = $region29
    $region28: #{_decoder_forward_impl.1} parent=1 // pred_region
      _
    $region29: #{_decoder_forward_impl.1} parent=1 // pred_fallthru
      _
    // Predicated region
    $region30: #{_decoder_forward_impl.1} parent=1 // pred_check
      _
    $region31: #{_decoder_forward_impl.1} parent=1 // pred_check_branch
      %31 = sbr.rel (0) target = $region33
    $region32: #{_decoder_forward_impl.1} parent=1 // pred_region
      _
    $region33: #{_decoder_forward_impl.1} parent=1 // pred_fallthru
      _
    // Predicated region
    $region34: #{_decoder_forward_impl.1} parent=1 // pred_check
      _
    $region35: #{_decoder_forward_impl.1} parent=1 // pred_check_branch
      %33 = sbr.rel (0) target = $region37
    $region36: #{_decoder_forward_impl.1} parent=1 // pred_region
      _
    $region37: #{_decoder_forward_impl.1} parent=1 // pred_fallthru
      _
    // Predicated region
    $region38: #{_decoder_forward_impl.1} parent=1 // pred_check
      _
    $region39: #{_decoder_forward_impl.1} parent=1 // pred_check_branch
      %35 = sbr.rel (0) target = $region41
    $region40: #{_decoder_forward_impl.1} parent=1 // pred_region
      _
    $region41: #{_decoder_forward_impl.1} parent=1 // pred_fallthru
      _
    %vm36 = vcmask 261120
    %37 = vst.msk [vmem:[#allocation2] sm:$0xff] %vm36, 0.0
    %38 = vst.msk [vmem:[#allocation2 + $0x8] sm:$0xff] %vm36, 0.0
    %39 = vst.msk [vmem:[#allocation2 + $0x10] sm:$0xff] %vm36, 0.0
    %vm40 = vcmask 257024
    %41 = vst.msk [vmem:[#allocation2 + $0x18] sm:$0xf] %vm40, 0.0
    %v42 = vld [vmem:[%s0] sm:$0xff]
    %v43 = vld [vmem:[%s0 + $0x8] sm:$0xff]
    %v44 = vld [vmem:[%s0 + $0x10] sm:$0xff]
    %v45 = vld [vmem:[%s0 + $0x18] sm:$0xff]
    %46 = vxpose.xlu0.b32.start [1/16] %v42, 128
    %47 = vxpose.xlu0.b32.cont [2/16] %v43, 128
    %48 = vxpose.xlu0.b32.cont [3/16] %v44, 128
    %49 = vxpose.xlu0.b32.cont [4/16] %v45, 128
    %50 = vxpose.xlu0.b32.cont [5/16] 0.0, 128
    %51 = vxpose.xlu0.b32.cont [6/16] 0.0, 128
    %52 = vxpose.xlu0.b32.cont [7/16] 0.0, 128
    %53 = vxpose.xlu0.b32.cont [8/16] 0.0, 128
    %54 = vxpose.xlu0.b32.cont [9/16] 0.0, 128
    %55 = vxpose.xlu0.b32.cont [10/16] 0.0, 128
    %56 = vxpose.xlu0.b32.cont [11/16] 0.0, 128
    %57 = vxpose.xlu0.b32.cont [12/16] 0.0, 128
    %58 = vxpose.xlu0.b32.cont [13/16] 0.0, 128
    %59 = vxpose.xlu0.b32.cont [14/16] 0.0, 128
    %60 = vxpose.xlu0.b32.cont [15/16] 0.0, 128
    %61 = vxpose.xlu0.b32.end [16/16] 0.0, 128
    %v62 = vpop.trf.xlu0
    %v63 = vpop.trf.xlu0
    %v64 = vpop.trf.xlu0
    %v65 = vpop.trf.xlu0
    %v66 = vpop.trf.xlu0
    %v67 = vpop.trf.xlu0
    %v68 = vpop.trf.xlu0
    %v69 = vpop.trf.xlu0
    %v70 = vpop.trf.xlu0
    %v71 = vpop.trf.xlu0
    %v72 = vpop.trf.xlu0
    %v73 = vpop.trf.xlu0
    %v74 = vpop.trf.xlu0
    %v75 = vpop.trf.xlu0
    %v76 = vpop.trf.xlu0
    %v77 = vpop.trf.xlu0
    %78 = vst.msk [vmem:[#allocation2 + $0x4] sm:$0xff] %vm36, %v62
    %s79 = scalar_lea.vmem %s0, 32
    %v80 = vld [vmem:[%s79] sm:$0xff]
    %v81 = vld [vmem:[%s79 + $0x8] sm:$0xff]
    %v82 = vld [vmem:[%s79 + $0x10] sm:$0xff]
    %v83 = vld [vmem:[%s79 + $0x18] sm:$0xff]
    %84 = vxpose.xlu0.b32.start [1/16] %v80, 128
    %85 = vxpose.xlu0.b32.cont [2/16] %v81, 128
    %86 = vxpose.xlu0.b32.cont [3/16] %v82, 128
    %87 = vxpose.xlu0.b32.cont [4/16] %v83, 128
    %88 = vxpose.xlu0.b32.cont [5/16] 0.0, 128
    %89 = vxpose.xlu0.b32.cont [6/16] 0.0, 128
    %90 = vxpose.xlu0.b32.cont [7/16] 0.0, 128
    %91 = vxpose.xlu0.b32.cont [8/16] 0.0, 128
    %92 = vxpose.xlu0.b32.cont [9/16] 0.0, 128
    %93 = vxpose.xlu0.b32.cont [10/16] 0.0, 128
    %94 = vxpose.xlu0.b32.cont [11/16] 0.0, 128
    %95 = vxpose.xlu0.b32.cont [12/16] 0.0, 128
    %96 = vxpose.xlu0.b32.cont [13/16] 0.0, 128
    %97 = vxpose.xlu0.b32.cont [14/16] 0.0, 128
    %98 = vxpose.xlu0.b32.cont [15/16] 0.0, 128
    %99 = vxpose.xlu0.b32.end [16/16] 0.0, 128
    %v100 = vpop.trf.xlu0
    %v101 = vpop.trf.xlu0
    %v102 = vpop.trf.xlu0
    %v103 = vpop.trf.xlu0
    %v104 = vpop.trf.xlu0
    %v105 = vpop.trf.xlu0
    %v106 = vpop.trf.xlu0
    %v107 = vpop.trf.xlu0
    %v108 = vpop.trf.xlu0
    %v109 = vpop.trf.xlu0
    %v110 = vpop.trf.xlu0
    %v111 = vpop.trf.xlu0
    %v112 = vpop.trf.xlu0
    %v113 = vpop.trf.xlu0
    %v114 = vpop.trf.xlu0
    %v115 = vpop.trf.xlu0
    %116 = vst.msk [vmem:[#allocation2 + $0x10] sm:$0xff] %vm36, %v100
    %v117 = vld [vmem:[#allocation2] sm:$0xff]
    %v118 = vld [vmem:[#allocation2 + $0x8] sm:$0xff]
    %v119 = vld [vmem:[#allocation2 + $0x10] sm:$0xff]
    %v120 = vld [vmem:[#allocation2 + $0x1] sm:$0xff]
    %v121 = vld [vmem:[#allocation2 + $0x9] sm:$0xff]
    %v122 = vld [vmem:[#allocation2 + $0x11] sm:$0xff]
    %v123 = vld [vmem:[#allocation2 + $0x2] sm:$0xff]
    %v124 = vld [vmem:[#allocation2 + $0xa] sm:$0xff]
    %v125 = vld [vmem:[#allocation2 + $0x12] sm:$0xff]
    %v126 = vld [vmem:[#allocation2 + $0x3] sm:$0xff]
    %v127 = vld [vmem:[#allocation2 + $0xb] sm:$0xff]
    %v128 = vld [vmem:[#allocation2 + $0x13] sm:$0xff]
    %v129 = vld [vmem:[#allocation2 + $0x4] sm:$0xff]
    %v130 = vld [vmem:[#allocation2 + $0xc] sm:$0xff]
    %v131 = vld [vmem:[#allocation2 + $0x14] sm:$0xff]
    %135 = vrot.lane.b32.xlu0 %v120, 32
    %v136 = vpop.permute.xlu0 %135
    %137 = vrot.lane.b32.xlu0 %v121, 32
    %v138 = vpop.permute.xlu0 %137
    %139 = vrot.lane.b32.xlu0 %v122, 32
    %v140 = vpop.permute.xlu0 %139
    %147 = vrot.lane.b32.xlu0 %v123, 64
    %v148 = vpop.permute.xlu0 %147
    %149 = vrot.lane.b32.xlu0 %v124, 64
    %v150 = vpop.permute.xlu0 %149
    %151 = vrot.lane.b32.xlu0 %v125, 64
    %v152 = vpop.permute.xlu0 %151
    %159 = vrot.lane.b32.xlu0 %v126, 96
    %v160 = vpop.permute.xlu0 %159
    %161 = vrot.lane.b32.xlu0 %v127, 96
    %v162 = vpop.permute.xlu0 %161
    %163 = vrot.lane.b32.xlu0 %v128, 96
    %v164 = vpop.permute.xlu0 %163
    %v168 = vsel %vm36, %v117, %v136
    %v169 = vsel %vm36, %v118, %v138
    %v170 = vsel %vm36, %v119, %v140
    %vm171 = vcmask 523264
    %v172 = vsel %vm171, %v168, %v148
    %v173 = vsel %vm171, %v169, %v150
    %v174 = vsel %vm171, %v170, %v152
    %vm175 = vcmask 785408
    %v176 = vsel %vm175, %v172, %v160
    %v177 = vsel %vm175, %v173, %v162
    %v178 = vsel %vm175, %v174, %v164
    %v179 = vld [vmem:[%s1] sm:$0xff]
    %v180 = vld [vmem:[%s1 + $0x8] sm:$0xff]
    %v181 = vld [vmem:[%s1 + $0x10] sm:$0xff]
    %v182 = vld [vmem:[%s1 + $0x18] sm:$0xff]
    %v183 = vld [vmem:[%s1 + $0x20] sm:$0xff]
    %v184 = vld [vmem:[%s1 + $0x28] sm:$0xff]
    %v185 = vld [vmem:[%s1 + $0x30] sm:$0xff]
    %v186 = vld [vmem:[%s1 + $0x38] sm:$0xff]
    %v187 = vld [vmem:[%s1 + $0x40] sm:$0xff]
    %v188 = vld [vmem:[%s1 + $0x48] sm:$0xff]
    %v189 = vld [vmem:[%s1 + $0x50] sm:$0xff]
    %v190 = vld [vmem:[%s1 + $0x58] sm:$0xff]
    %v191 = vld [vmem:[%s1 + $0x60] sm:$0xff]
    %v192 = vld [vmem:[%s1 + $0x68] sm:$0xff]
    %v193 = vld [vmem:[%s1 + $0x70] sm:$0xff]
    %v194 = vld [vmem:[%s1 + $0x78] sm:$0xff]
    %v195 = vld [vmem:[%s1 + $0x80] sm:$0xff]
    %v196 = vld [vmem:[%s1 + $0x88] sm:$0xff]
    %v197 = vld [vmem:[%s1 + $0x90] sm:$0xff]
    %v198 = vld [vmem:[%s1 + $0x98] sm:$0xff]
    %v200 = vsel %vm36, %v129, 0
    %v203 = vsel %vm36, %v130, 0
    %v206 = vsel %vm36, %v131, 0
    %208 = vmatpush.msra.mxu0 %v194
    %209 = vmatpush.msra.mxu0 %v193
    %210 = vmatpush.msra.mxu0 %v192
    %211 = vmatpush.msra.mxu0 %v191
    %212 = vmatpush.msra.mxu0 %v190
    %213 = vmatpush.msra.mxu0 %v189
    %214 = vmatpush.msra.mxu0 %v188
    %215 = vmatpush.msra.mxu0 %v187
    %216 = vmatpush.msra.mxu0 %v186
    %217 = vmatpush.msra.mxu0 %v185
    %218 = vmatpush.msra.mxu0 %v184
    %219 = vmatpush.msra.mxu0 %v183
    %220 = vmatpush.msra.mxu0 %v182
    %221 = vmatpush.msra.mxu0 %v181
    %222 = vmatpush.msra.mxu0 %v180
    %223 = vmatpush.msra.mxu0 %v179
    %224 = vmatmul.f32.gmra.mxu0 %v176
    %v225 = vpop.f32.mrf.mxu0
    %v226 = vadd.f32 0.0, %v225
    %227 = vmatmul.f32.gmra.mxu0 %v177
    %v228 = vpop.f32.mrf.mxu0
    %v229 = vadd.f32 0.0, %v228
    %230 = vmatmul.f32.gmra.mxu0 %v178
    %v231 = vpop.f32.mrf.mxu0
    %v232 = vadd.f32 0.0, %v231
    %233 = vdwg.mxu0
    %234 = vmatpush.msra.mxu0 0.0
    %235 = vmatpush.msra.mxu0 0.0
    %236 = vmatpush.msra.mxu0 0.0
    %237 = vmatpush.msra.mxu0 0.0
    %238 = vmatpush.msra.mxu0 0.0
    %239 = vmatpush.msra.mxu0 0.0
    %240 = vmatpush.msra.mxu0 0.0
    %241 = vmatpush.msra.mxu0 0.0
    %242 = vmatpush.msra.mxu0 0.0
    %243 = vmatpush.msra.mxu0 0.0
    %244 = vmatpush.msra.mxu0 0.0
    %245 = vmatpush.msra.mxu0 0.0
    %246 = vmatpush.msra.mxu0 %v198
    %247 = vmatpush.msra.mxu0 %v197
    %248 = vmatpush.msra.mxu0 %v196
    %249 = vmatpush.msra.mxu0 %v195
    %250 = vmatmul.f32.gmra.mxu0 %v200
    %v251 = vpop.f32.mrf.mxu0
    %v252 = vadd.f32 %v226, %v251
    %253 = vmatmul.f32.gmra.mxu0 %v203
    %v254 = vpop.f32.mrf.mxu0
    %v255 = vadd.f32 %v229, %v254
    %256 = vmatmul.f32.gmra.mxu0 %v206
    %v257 = vpop.f32.mrf.mxu0
    %v258 = vadd.f32 %v232, %v257
    %259 = vdwg.mxu0
    %vm260 = vcmask 195584
    %v262 = vsel %vm260, 0.041666668, 0
    %264 = vmatpush.msra.mxu0 0.0
    %265 = vmatpush.msra.mxu0 0.0
    %266 = vmatpush.msra.mxu0 0.0
    %267 = vmatpush.msra.mxu0 0.0
    %268 = vmatpush.msra.mxu0 0.0
    %269 = vmatpush.msra.mxu0 0.0
    %270 = vmatpush.msra.mxu0 0.0
    %271 = vmatpush.msra.mxu0 0.0
    %272 = vmatpush.msra.mxu0 0.0
    %273 = vmatpush.msra.mxu0 0.0
    %274 = vmatpush.msra.mxu0 0.0
    %275 = vmatpush.msra.mxu0 0.0
    %276 = vmatpush.msra.mxu0 0.0
    %277 = vmatpush.msra.mxu0 %v258
    %278 = vmatpush.msra.mxu0 %v255
    %279 = vmatpush.msra.mxu0 %v252
    %280 = vmatmul.f32.gmra.mxu0 %v262
    %v281 = vpop.f32.mrf.mxu0
    %v282 = vadd.f32 0.0, %v281
    %283 = vdwg.mxu0
    %v284 = vmul.f32 %v252, %v252
    %v285 = vmul.f32 %v255, %v255
    %v286 = vmul.f32 %v258, %v258
    %287 = vmatpush.msra.mxu0 0.0
    %288 = vmatpush.msra.mxu0 0.0
    %289 = vmatpush.msra.mxu0 0.0
    %290 = vmatpush.msra.mxu0 0.0
    %291 = vmatpush.msra.mxu0 0.0
    %292 = vmatpush.msra.mxu0 0.0
    %293 = vmatpush.msra.mxu0 0.0
    %294 = vmatpush.msra.mxu0 0.0
    %295 = vmatpush.msra.mxu0 0.0
    %296 = vmatpush.msra.mxu0 0.0
    %297 = vmatpush.msra.mxu0 0.0
    %298 = vmatpush.msra.mxu0 0.0
    %299 = vmatpush.msra.mxu0 0.0
    %300 = vmatpush.msra.mxu0 %v286
    %301 = vmatpush.msra.mxu0 %v285
    %302 = vmatpush.msra.mxu0 %v284
    %303 = vmatmul.f32.gmra.mxu0 %v262
    %v304 = vpop.f32.mrf.mxu0
    %v305 = vadd.f32 0.0, %v304
    %306 = vdwg.mxu0
    %v307 = vmul.f32 %v282, %v282
    %v308 = vsub.f32 %v305, %v307
    %v309 = vmax.f32 %v308, 0.0
    %v310 = vld [vmem:[%s2] sm:$0x1]
    %v311 = vadd.f32 %v309, 1e-05
    %v312 = vrsqrt.pop %v311
    %v313 = vmul.f32 %v312, %v311
    %v314 = vmul.f32 %v313, %v312
    %v315 = vmul.f32 0.5, %v314
    %v316 = vsub.f32 1.5, %v315
    %v317 = vmul.f32 %v312, %v316
    %vm318 = vweird.f32 %v311
    %vm319 = vweird.f32 %v312
    %vm320 = vmor %vm318, %vm319
    %v321 = vsel %vm320, %v312, %v317
    %v322 = vmul.f32 %v310, %v321
    %v323 = vld [vmem:[%s3] sm:$0x1]
    %v324 = vmul.f32 %v282, %v322
    %v325 = vsub.f32 %v323, %v324
    %v327 = vperm.slane %v322, 0
    %v329 = vmul.f32 %v252, %v327
    %v330 = vmul.f32 %v255, %v327
    %v331 = vmul.f32 %v258, %v327
    %v333 = vperm.slane %v325, 0
    %v335 = vadd.f32 %v329, %v333
    %v336 = vadd.f32 %v330, %v333
    %v337 = vadd.f32 %v331, %v333
    %v338 = vmax.f32 %v335, 0.0
    %v339 = vmax.f32 %v336, 0.0
    %v340 = vmax.f32 %v337, 0.0
    %vm341 = vcmask 130048
    %342 = vst.msk [vmem:[#allocation3] sm:$0xff] %vm341, 0.0
    %343 = vst.msk [vmem:[#allocation3 + $0x8] sm:$0xff] %vm341, 0.0
    %344 = vst.msk [vmem:[#allocation3 + $0x10] sm:$0xff] %vm341, 0.0
    %345 = vst.msk [vmem:[#allocation3 + $0x18] sm:$0xff] %vm341, 0.0
    %346 = vst.msk [vmem:[#allocation3 + $0x20] sm:$0xff] %vm341, 0.0
    %347 = vst.msk [vmem:[#allocation3 + $0x28] sm:$0xff] %vm341, 0.0
    %vm348 = vcmask 125952
    %349 = vst.msk [vmem:[#allocation3 + $0x30] sm:$0xf] %vm348, 0.0
    %s350 = scalar_lea.vmem [#allocation3], 2
    %351 = vst [vmem:[%s350] ss:$2 sm:$0xff] %v338
    %s352 = scalar_lea.vmem [#allocation3], 18
    %353 = vst [vmem:[%s352] ss:$2 sm:$0xf] %v339
    %vm356 = vcmask 1043456
    %v357 = vrot.slane %v339, 4
    %v358 = vrot.slane %v340, 4
    %v359 = vsel %vm356, %v357, %v358
    %s362 = scalar_lea.vmem [#allocation3], 27
    %363 = vst [vmem:[%s362] ss:$2 sm:$0xff] %v359
    %s364 = scalar_lea.vmem [#allocation3], 43
    %365 = vst [vmem:[%s364] ss:$2 sm:$0xf] %v358
    %v366 = vld [vmem:[#allocation3] sm:$0xff]
    %v367 = vld [vmem:[#allocation3 + $0x8] sm:$0xff]
    %v368 = vld [vmem:[#allocation3 + $0x10] sm:$0xff]
    %v369 = vld [vmem:[#allocation3 + $0x18] sm:$0xff]
    %v370 = vld [vmem:[#allocation3 + $0x20] sm:$0xff]
    %v371 = vld [vmem:[#allocation3 + $0x28] sm:$0xff]
    %v372 = vld [vmem:[#allocation3 + $0x30] sm:$0x3]
    %v373 = vld [vmem:[#allocation3 + $0x1] sm:$0xff]
    %v374 = vld [vmem:[#allocation3 + $0x9] sm:$0xff]
    %v375 = vld [vmem:[#allocation3 + $0x11] sm:$0xff]
    %v376 = vld [vmem:[#allocation3 + $0x19] sm:$0xff]
    %v377 = vld [vmem:[#allocation3 + $0x21] sm:$0xff]
    %v378 = vld [vmem:[#allocation3 + $0x29] sm:$0xff]
    %v379 = vld [vmem:[#allocation3 + $0x31] sm:$0x3]
    %v380 = vld [vmem:[#allocation3 + $0x2] sm:$0xff]
    %v381 = vld [vmem:[#allocation3 + $0xa] sm:$0xff]
    %v382 = vld [vmem:[#allocation3 + $0x12] sm:$0xff]
    %v383 = vld [vmem:[#allocation3 + $0x1a] sm:$0xff]
    %v384 = vld [vmem:[#allocation3 + $0x22] sm:$0xff]
    %v385 = vld [vmem:[#allocation3 + $0x2a] sm:$0xff]
    %v386 = vld [vmem:[#allocation3 + $0x32] sm:$0x3]
    %394 = vrot.lane.b32.xlu0 %v373, 16
    %v395 = vpop.permute.xlu0 %394
    %396 = vrot.lane.b32.xlu0 %v374, 16
    %v397 = vpop.permute.xlu0 %396
    %398 = vrot.lane.b32.xlu0 %v375, 16
    %v399 = vpop.permute.xlu0 %398
    %400 = vrot.lane.b32.xlu0 %v376, 16
    %v401 = vpop.permute.xlu0 %400
    %402 = vrot.lane.b32.xlu0 %v377, 16
    %v403 = vpop.permute.xlu0 %402
    %404 = vrot.lane.b32.xlu0 %v378, 16
    %v405 = vpop.permute.xlu0 %404
    %406 = vrot.lane.b32.xlu0 %v379, 16
    %v407 = vpop.permute.xlu0 %406
    %422 = vrot.lane.b32.xlu0 %v380, 32
    %v423 = vpop.permute.xlu0 %422
    %424 = vrot.lane.b32.xlu0 %v381, 32
    %v425 = vpop.permute.xlu0 %424
    %426 = vrot.lane.b32.xlu0 %v382, 32
    %v427 = vpop.permute.xlu0 %426
    %428 = vrot.lane.b32.xlu0 %v383, 32
    %v429 = vpop.permute.xlu0 %428
    %430 = vrot.lane.b32.xlu0 %v384, 32
    %v431 = vpop.permute.xlu0 %430
    %432 = vrot.lane.b32.xlu0 %v385, 32
    %v433 = vpop.permute.xlu0 %432
    %434 = vrot.lane.b32.xlu0 %v386, 32
    %v435 = vpop.permute.xlu0 %434
    %v443 = vsel %vm341, %v366, %v395
    %v444 = vsel %vm341, %v367, %v397
    %v445 = vsel %vm341, %v368, %v399
    %v446 = vsel %vm341, %v369, %v401
    %v447 = vsel %vm341, %v370, %v403
    %v448 = vsel %vm341, %v371, %v405
    %v449 = vsel %vm341, %v372, %v407
    %v450 = vsel %vm36, %v443, %v423
    %v451 = vsel %vm36, %v444, %v425
    %v452 = vsel %vm36, %v445, %v427
    %v453 = vsel %vm36, %v446, %v429
    %v454 = vsel %vm36, %v447, %v431
    %v455 = vsel %vm36, %v448, %v433
    %v456 = vsel %vm36, %v449, %v435
    %v457 = vld [vmem:[%s4] sm:$0xff]
    %v458 = vld [vmem:[%s4 + $0x8] sm:$0xff]
    %v459 = vld [vmem:[%s4 + $0x10] sm:$0xff]
    %v460 = vld [vmem:[%s4 + $0x18] sm:$0xff]
    %v461 = vld [vmem:[%s4 + $0x20] sm:$0xff]
    %v462 = vld [vmem:[%s4 + $0x28] sm:$0xff]
    %vm463 = vcmask 392192
    %v465 = vsel %vm463, %v450, 0
    %v468 = vsel %vm463, %v451, 0
    %v471 = vsel %vm463, %v452, 0
    %v474 = vsel %vm463, %v453, 0
    %v477 = vsel %vm463, %v454, 0
    %v480 = vsel %vm463, %v455, 0
    %v483 = vsel %vm463, %v456, 0
    %485 = vmatpush.msra.mxu0 0.0
    %486 = vmatpush.msra.mxu0 0.0
    %487 = vmatpush.msra.mxu0 0.0
    %488 = vmatpush.msra.mxu0 0.0
    %489 = vmatpush.msra.mxu0 0.0
    %490 = vmatpush.msra.mxu0 0.0
    %491 = vmatpush.msra.mxu0 0.0
    %492 = vmatpush.msra.mxu0 0.0
    %493 = vmatpush.msra.mxu0 0.0
    %494 = vmatpush.msra.mxu0 0.0
    %495 = vmatpush.msra.mxu0 %v462
    %496 = vmatpush.msra.mxu0 %v461
    %497 = vmatpush.msra.mxu0 %v460
    %498 = vmatpush.msra.mxu0 %v459
    %499 = vmatpush.msra.mxu0 %v458
    %500 = vmatpush.msra.mxu0 %v457
    %501 = vmatmul.f32.gmra.mxu0 %v465
    %v502 = vpop.f32.mrf.mxu0
    %v503 = vadd.f32 0.0, %v502
    %504 = vmatmul.f32.gmra.mxu0 %v468
    %v505 = vpop.f32.mrf.mxu0
    %v506 = vadd.f32 0.0, %v505
    %507 = vmatmul.f32.gmra.mxu0 %v471
    %v508 = vpop.f32.mrf.mxu0
    %v509 = vadd.f32 0.0, %v508
    %510 = vmatmul.f32.gmra.mxu0 %v474
    %v511 = vpop.f32.mrf.mxu0
    %v512 = vadd.f32 0.0, %v511
    %513 = vmatmul.f32.gmra.mxu0 %v477
    %v514 = vpop.f32.mrf.mxu0
    %v515 = vadd.f32 0.0, %v514
    %516 = vmatmul.f32.gmra.mxu0 %v480
    %v517 = vpop.f32.mrf.mxu0
    %v518 = vadd.f32 0.0, %v517
    %519 = vmatmul.f32.gmra.mxu0 %v483
    %v520 = vpop.f32.mrf.mxu0
    %v521 = vadd.f32 0.0, %v520
    %522 = vdwg.mxu0
    %vm523 = vcmask 408576
    %v525 = vsel %vm523, 0.02, 0
    %vm527 = vcmask 1041408
    %v529 = vsel %vm527, %v521, 0
    %531 = vmatpush.msra.mxu0 0.0
    %532 = vmatpush.msra.mxu0 0.0
    %533 = vmatpush.msra.mxu0 0.0
    %534 = vmatpush.msra.mxu0 0.0
    %535 = vmatpush.msra.mxu0 0.0
    %536 = vmatpush.msra.mxu0 0.0
    %537 = vmatpush.msra.mxu0 0.0
    %538 = vmatpush.msra.mxu0 0.0
    %539 = vmatpush.msra.mxu0 0.0
    %540 = vmatpush.msra.mxu0 %v529
    %541 = vmatpush.msra.mxu0 %v518
    %542 = vmatpush.msra.mxu0 %v515
    %543 = vmatpush.msra.mxu0 %v512
    %544 = vmatpush.msra.mxu0 %v509
    %545 = vmatpush.msra.mxu0 %v506
    %546 = vmatpush.msra.mxu0 %v503
    %547 = vmatmul.f32.gmra.mxu0 %v525
    %v548 = vpop.f32.mrf.mxu0
    %v549 = vadd.f32 0.0, %v548
    %550 = vdwg.mxu0
    %v551 = vmul.f32 %v503, %v503
    %v552 = vmul.f32 %v506, %v506
    %v553 = vmul.f32 %v509, %v509
    %v554 = vmul.f32 %v512, %v512
    %v555 = vmul.f32 %v515, %v515
    %v556 = vmul.f32 %v518, %v518
    %v557 = vmul.f32 %v521, %v521
    %v559 = vsel %vm527, %v557, 0
    %561 = vmatpush.msra.mxu0 0.0
    %562 = vmatpush.msra.mxu0 0.0
    %563 = vmatpush.msra.mxu0 0.0
    %564 = vmatpush.msra.mxu0 0.0
    %565 = vmatpush.msra.mxu0 0.0
    %566 = vmatpush.msra.mxu0 0.0
    %567 = vmatpush.msra.mxu0 0.0
    %568 = vmatpush.msra.mxu0 0.0
    %569 = vmatpush.msra.mxu0 0.0
    %570 = vmatpush.msra.mxu0 %v559
    %571 = vmatpush.msra.mxu0 %v556
    %572 = vmatpush.msra.mxu0 %v555
    %573 = vmatpush.msra.mxu0 %v554
    %574 = vmatpush.msra.mxu0 %v553
    %575 = vmatpush.msra.mxu0 %v552
    %576 = vmatpush.msra.mxu0 %v551
    %577 = vmatmul.f32.gmra.mxu0 %v525
    %v578 = vpop.f32.mrf.mxu0
    %v579 = vadd.f32 0.0, %v578
    %580 = vdwg.mxu0
    %v581 = vmul.f32 %v549, %v549
    %v582 = vsub.f32 %v579, %v581
    %v583 = vmax.f32 %v582, 0.0
    %v584 = vld [vmem:[%s5] sm:$0x1]
    %v585 = vadd.f32 %v583, 1e-05
    %v586 = vrsqrt.pop %v585
    %v587 = vmul.f32 %v586, %v585
    %v588 = vmul.f32 %v587, %v586
    %v589 = vmul.f32 0.5, %v588
    %v590 = vsub.f32 1.5, %v589
    %v591 = vmul.f32 %v586, %v590
    %vm592 = vweird.f32 %v585
    %vm593 = vweird.f32 %v586
    %vm594 = vmor %vm592, %vm593
    %v595 = vsel %vm594, %v586, %v591
    %v596 = vmul.f32 %v584, %v595
    %v597 = vld [vmem:[%s6] sm:$0x1]
    %v598 = vmul.f32 %v549, %v596
    %v599 = vsub.f32 %v597, %v598
    %v601 = vperm.slane %v596, 0
    %v603 = vmul.f32 %v503, %v601
    %v604 = vmul.f32 %v506, %v601
    %v605 = vmul.f32 %v509, %v601
    %v606 = vmul.f32 %v512, %v601
    %v607 = vmul.f32 %v515, %v601
    %v608 = vmul.f32 %v518, %v601
    %v609 = vmul.f32 %v521, %v601
    %v611 = vperm.slane %v599, 0
    %v613 = vadd.f32 %v603, %v611
    %v614 = vadd.f32 %v604, %v611
    %v615 = vadd.f32 %v605, %v611
    %v616 = vadd.f32 %v606, %v611
    %v617 = vadd.f32 %v607, %v611
    %v618 = vadd.f32 %v608, %v611
    %v619 = vadd.f32 %v609, %v611
    %v620 = vmax.f32 %v613, 0.0
    %v621 = vmax.f32 %v614, 0.0
    %v622 = vmax.f32 %v615, 0.0
    %v623 = vmax.f32 %v616, 0.0
    %v624 = vmax.f32 %v617, 0.0
    %v625 = vmax.f32 %v618, 0.0
    %v626 = vmax.f32 %v619, 0.0
    %vm627 = vcmask 64512
    %628 = vst.msk [vmem:[#allocation4] sm:$0xff] %vm627, 0.0
    %629 = vst.msk [vmem:[#allocation4 + $0x8] sm:$0xff] %vm627, 0.0
    %630 = vst.msk [vmem:[#allocation4 + $0x10] sm:$0xff] %vm627, 0.0
    %631 = vst.msk [vmem:[#allocation4 + $0x18] sm:$0xff] %vm627, 0.0
    %632 = vst.msk [vmem:[#allocation4 + $0x20] sm:$0xff] %vm627, 0.0
    %633 = vst.msk [vmem:[#allocation4 + $0x28] sm:$0xff] %vm627, 0.0
    %634 = vst.msk [vmem:[#allocation4 + $0x30] sm:$0xff] %vm627, 0.0
    %635 = vst.msk [vmem:[#allocation4 + $0x38] sm:$0xff] %vm627, 0.0
    %636 = vst.msk [vmem:[#allocation4 + $0x40] sm:$0xff] %vm627, 0.0
    %637 = vst.msk [vmem:[#allocation4 + $0x48] sm:$0xff] %vm627, 0.0
    %638 = vst.msk [vmem:[#allocation4 + $0x50] sm:$0xff] %vm627, 0.0
    %639 = vst.msk [vmem:[#allocation4 + $0x58] sm:$0xff] %vm627, 0.0
    %640 = vst.msk [vmem:[#allocation4 + $0x60] sm:$0xff] %vm627, 0.0
    %s641 = scalar_lea.vmem [#allocation4], 2
    %642 = vst [vmem:[%s641] ss:$2 sm:$0xff] %v620
    %s643 = scalar_lea.vmem [#allocation4], 18
    %644 = vst [vmem:[%s643] ss:$2 sm:$0xff] %v621
    %s645 = scalar_lea.vmem [#allocation4], 34
    %646 = vst [vmem:[%s645] ss:$2 sm:$0xff] %v622
    %s647 = scalar_lea.vmem [#allocation4], 50
    %648 = vst [vmem:[%s647] ss:$2 sm:$0x1] %v623
    %vm653 = vcmask 1046528
    %v654 = vrot.slane %v623, 1
    %v655 = vrot.slane %v624, 1
    %v656 = vsel %vm653, %v654, %v655
    %v657 = vrot.slane %v625, 1
    %v658 = vsel %vm653, %v655, %v657
    %v659 = vrot.slane %v626, 1
    %v660 = vsel %vm653, %v657, %v659
    %s665 = scalar_lea.vmem [#allocation4], 53
    %666 = vst [vmem:[%s665] ss:$2 sm:$0xff] %v656
    %s667 = scalar_lea.vmem [#allocation4], 69
    %668 = vst [vmem:[%s667] ss:$2 sm:$0xff] %v658
    %s669 = scalar_lea.vmem [#allocation4], 85
    %670 = vst [vmem:[%s669] ss:$2 sm:$0xff] %v660
    %s671 = scalar_lea.vmem [#allocation4], 101
    %672 = vst [vmem:[%s671] ss:$2 sm:$0x1] %v659
    %v673 = vld [vmem:[#allocation4] sm:$0xff]
    %v674 = vld [vmem:[#allocation4 + $0x8] sm:$0xff]
    %v675 = vld [vmem:[#allocation4 + $0x10] sm:$0xff]
    %v676 = vld [vmem:[#allocation4 + $0x18] sm:$0xff]
    %v677 = vld [vmem:[#allocation4 + $0x20] sm:$0xff]
    %v678 = vld [vmem:[#allocation4 + $0x28] sm:$0xff]
    %v679 = vld [vmem:[#allocation4 + $0x30] sm:$0xff]
    %v680 = vld [vmem:[#allocation4 + $0x38] sm:$0xff]
    %v681 = vld [vmem:[#allocation4 + $0x40] sm:$0xff]
    %v682 = vld [vmem:[#allocation4 + $0x48] sm:$0xff]
    %v683 = vld [vmem:[#allocation4 + $0x50] sm:$0xff]
    %v684 = vld [vmem:[#allocation4 + $0x58] sm:$0xff]
    %v685 = vld [vmem:[#allocation4 + $0x60] sm:$0x3f]
    %v686 = vld [vmem:[#allocation4 + $0x1] sm:$0xff]
    %v687 = vld [vmem:[#allocation4 + $0x9] sm:$0xff]
    %v688 = vld [vmem:[#allocation4 + $0x11] sm:$0xff]
    %v689 = vld [vmem:[#allocation4 + $0x19] sm:$0xff]
    %v690 = vld [vmem:[#allocation4 + $0x21] sm:$0xff]
    %v691 = vld [vmem:[#allocation4 + $0x29] sm:$0xff]
    %v692 = vld [vmem:[#allocation4 + $0x31] sm:$0xff]
    %v693 = vld [vmem:[#allocation4 + $0x39] sm:$0xff]
    %v694 = vld [vmem:[#allocation4 + $0x41] sm:$0xff]
    %v695 = vld [vmem:[#allocation4 + $0x49] sm:$0xff]
    %v696 = vld [vmem:[#allocation4 + $0x51] sm:$0xff]
    %v697 = vld [vmem:[#allocation4 + $0x59] sm:$0xff]
    %v698 = vld [vmem:[#allocation4 + $0x61] sm:$0x3f]
    %v699 = vld [vmem:[#allocation4 + $0x2] sm:$0xff]
    %v700 = vld [vmem:[#allocation4 + $0xa] sm:$0xff]
    %v701 = vld [vmem:[#allocation4 + $0x12] sm:$0xff]
    %v702 = vld [vmem:[#allocation4 + $0x1a] sm:$0xff]
    %v703 = vld [vmem:[#allocation4 + $0x22] sm:$0xff]
    %v704 = vld [vmem:[#allocation4 + $0x2a] sm:$0xff]
    %v705 = vld [vmem:[#allocation4 + $0x32] sm:$0xff]
    %v706 = vld [vmem:[#allocation4 + $0x3a] sm:$0xff]
    %v707 = vld [vmem:[#allocation4 + $0x42] sm:$0xff]
    %v708 = vld [vmem:[#allocation4 + $0x4a] sm:$0xff]
    %v709 = vld [vmem:[#allocation4 + $0x52] sm:$0xff]
    %v710 = vld [vmem:[#allocation4 + $0x5a] sm:$0xff]
    %v711 = vld [vmem:[#allocation4 + $0x62] sm:$0x3f]
    %725 = vrot.lane.b32.xlu0 %v686, 8
    %v726 = vpop.permute.xlu0 %725
    %727 = vrot.lane.b32.xlu0 %v687, 8
    %v728 = vpop.permute.xlu0 %727
    %729 = vrot.lane.b32.xlu0 %v688, 8
    %v730 = vpop.permute.xlu0 %729
    %731 = vrot.lane.b32.xlu0 %v689, 8
    %v732 = vpop.permute.xlu0 %731
    %733 = vrot.lane.b32.xlu0 %v690, 8
    %v734 = vpop.permute.xlu0 %733
    %735 = vrot.lane.b32.xlu0 %v691, 8
    %v736 = vpop.permute.xlu0 %735
    %737 = vrot.lane.b32.xlu0 %v692, 8
    %v738 = vpop.permute.xlu0 %737
    %739 = vrot.lane.b32.xlu0 %v693, 8
    %v740 = vpop.permute.xlu0 %739
    %741 = vrot.lane.b32.xlu0 %v694, 8
    %v742 = vpop.permute.xlu0 %741
    %743 = vrot.lane.b32.xlu0 %v695, 8
    %v744 = vpop.permute.xlu0 %743
    %745 = vrot.lane.b32.xlu0 %v696, 8
    %v746 = vpop.permute.xlu0 %745
    %747 = vrot.lane.b32.xlu0 %v697, 8
    %v748 = vpop.permute.xlu0 %747
    %749 = vrot.lane.b32.xlu0 %v698, 8
    %v750 = vpop.permute.xlu0 %749
    %777 = vrot.lane.b32.xlu0 %v699, 16
    %v778 = vpop.permute.xlu0 %777
    %779 = vrot.lane.b32.xlu0 %v700, 16
    %v780 = vpop.permute.xlu0 %779
    %781 = vrot.lane.b32.xlu0 %v701, 16
    %v782 = vpop.permute.xlu0 %781
    %783 = vrot.lane.b32.xlu0 %v702, 16
    %v784 = vpop.permute.xlu0 %783
    %785 = vrot.lane.b32.xlu0 %v703, 16
    %v786 = vpop.permute.xlu0 %785
    %787 = vrot.lane.b32.xlu0 %v704, 16
    %v788 = vpop.permute.xlu0 %787
    %789 = vrot.lane.b32.xlu0 %v705, 16
    %v790 = vpop.permute.xlu0 %789
    %791 = vrot.lane.b32.xlu0 %v706, 16
    %v792 = vpop.permute.xlu0 %791
    %793 = vrot.lane.b32.xlu0 %v707, 16
    %v794 = vpop.permute.xlu0 %793
    %795 = vrot.lane.b32.xlu0 %v708, 16
    %v796 = vpop.permute.xlu0 %795
    %797 = vrot.lane.b32.xlu0 %v709, 16
    %v798 = vpop.permute.xlu0 %797
    %799 = vrot.lane.b32.xlu0 %v710, 16
    %v800 = vpop.permute.xlu0 %799
    %801 = vrot.lane.b32.xlu0 %v711, 16
    %v802 = vpop.permute.xlu0 %801
    %v816 = vsel %vm627, %v673, %v726
    %v817 = vsel %vm627, %v674, %v728
    %v818 = vsel %vm627, %v675, %v730
    %v819 = vsel %vm627, %v676, %v732
    %v820 = vsel %vm627, %v677, %v734
    %v821 = vsel %vm627, %v678, %v736
    %v822 = vsel %vm627, %v679, %v738
    %v823 = vsel %vm627, %v680, %v740
    %v824 = vsel %vm627, %v681, %v742
    %v825 = vsel %vm627, %v682, %v744
    %v826 = vsel %vm627, %v683, %v746
    %v827 = vsel %vm627, %v684, %v748
    %v828 = vsel %vm627, %v685, %v750
    %v829 = vsel %vm341, %v816, %v778
    %v830 = vsel %vm341, %v817, %v780
    %v831 = vsel %vm341, %v818, %v782
    %v832 = vsel %vm341, %v819, %v784
    %v833 = vsel %vm341, %v820, %v786
    %v834 = vsel %vm341, %v821, %v788
    %v835 = vsel %vm341, %v822, %v790
    %v836 = vsel %vm341, %v823, %v792
    %v837 = vsel %vm341, %v824, %v794
    %v838 = vsel %vm341, %v825, %v796
    %v839 = vsel %vm341, %v826, %v798
    %v840 = vsel %vm341, %v827, %v800
    %v841 = vsel %vm341, %v828, %v802
    %v842 = vld [vmem:[%s7] sm:$0xff]
    %v843 = vld [vmem:[%s7 + $0x8] sm:$0xff]
    %v844 = vld [vmem:[%s7 + $0x10] sm:$0xff]
    %v846 = vsel %vm260, %v829, 0
    %v849 = vsel %vm260, %v830, 0
    %v852 = vsel %vm260, %v831, 0
    %v855 = vsel %vm260, %v832, 0
    %v858 = vsel %vm260, %v833, 0
    %v861 = vsel %vm260, %v834, 0
    %v864 = vsel %vm260, %v835, 0
    %v867 = vsel %vm260, %v836, 0
    %v870 = vsel %vm260, %v837, 0
    %v873 = vsel %vm260, %v838, 0
    %v876 = vsel %vm260, %v839, 0
    %v879 = vsel %vm260, %v840, 0
    %v882 = vsel %vm260, %v841, 0
    %884 = vmatpush.msra.mxu0 0.0
    %885 = vmatpush.msra.mxu0 0.0
    %886 = vmatpush.msra.mxu0 0.0
    %887 = vmatpush.msra.mxu0 0.0
    %888 = vmatpush.msra.mxu0 0.0
    %889 = vmatpush.msra.mxu0 0.0
    %890 = vmatpush.msra.mxu0 0.0
    %891 = vmatpush.msra.mxu0 0.0
    %892 = vmatpush.msra.mxu0 0.0
    %893 = vmatpush.msra.mxu0 0.0
    %894 = vmatpush.msra.mxu0 0.0
    %895 = vmatpush.msra.mxu0 0.0
    %896 = vmatpush.msra.mxu0 0.0
    %897 = vmatpush.msra.mxu0 %v844
    %898 = vmatpush.msra.mxu0 %v843
    %899 = vmatpush.msra.mxu0 %v842
    %900 = vmatmul.f32.gmra.mxu0 %v846
    %v901 = vpop.f32.mrf.mxu0
    %v902 = vadd.f32 0.0, %v901
    %903 = vmatmul.f32.gmra.mxu0 %v849
    %v904 = vpop.f32.mrf.mxu0
    %v905 = vadd.f32 0.0, %v904
    %906 = vmatmul.f32.gmra.mxu0 %v852
    %v907 = vpop.f32.mrf.mxu0
    %v908 = vadd.f32 0.0, %v907
    %909 = vmatmul.f32.gmra.mxu0 %v855
    %v910 = vpop.f32.mrf.mxu0
    %v911 = vadd.f32 0.0, %v910
    %912 = vmatmul.f32.gmra.mxu0 %v858
    %v913 = vpop.f32.mrf.mxu0
    %v914 = vadd.f32 0.0, %v913
    %915 = vmatmul.f32.gmra.mxu0 %v861
    %v916 = vpop.f32.mrf.mxu0
    %v917 = vadd.f32 0.0, %v916
    %918 = vmatmul.f32.gmra.mxu0 %v864
    %v919 = vpop.f32.mrf.mxu0
    %v920 = vadd.f32 0.0, %v919
    %921 = vmatmul.f32.gmra.mxu0 %v867
    %v922 = vpop.f32.mrf.mxu0
    %v923 = vadd.f32 0.0, %v922
    %924 = vmatmul.f32.gmra.mxu0 %v870
    %v925 = vpop.f32.mrf.mxu0
    %v926 = vadd.f32 0.0, %v925
    %927 = vmatmul.f32.gmra.mxu0 %v873
    %v928 = vpop.f32.mrf.mxu0
    %v929 = vadd.f32 0.0, %v928
    %930 = vmatmul.f32.gmra.mxu0 %v876
    %v931 = vpop.f32.mrf.mxu0
    %v932 = vadd.f32 0.0, %v931
    %933 = vmatmul.f32.gmra.mxu0 %v879
    %v934 = vpop.f32.mrf.mxu0
    %v935 = vadd.f32 0.0, %v934
    %936 = vmatmul.f32.gmra.mxu0 %v882
    %v937 = vpop.f32.mrf.mxu0
    %v938 = vadd.f32 0.0, %v937
    %939 = vdwg.mxu0
    %vm940 = vcmask 834560
    %v942 = vsel %vm940, 0.009803922, 0
    %vm944 = vcmask 1045504
    %v946 = vsel %vm944, %v938, 0
    %948 = vmatpush.msra.mxu0 0.0
    %949 = vmatpush.msra.mxu0 0.0
    %950 = vmatpush.msra.mxu0 0.0
    %951 = vmatpush.msra.mxu0 %v946
    %952 = vmatpush.msra.mxu0 %v935
    %953 = vmatpush.msra.mxu0 %v932
    %954 = vmatpush.msra.mxu0 %v929
    %955 = vmatpush.msra.mxu0 %v926
    %956 = vmatpush.msra.mxu0 %v923
    %957 = vmatpush.msra.mxu0 %v920
    %958 = vmatpush.msra.mxu0 %v917
    %959 = vmatpush.msra.mxu0 %v914
    %960 = vmatpush.msra.mxu0 %v911
    %961 = vmatpush.msra.mxu0 %v908
    %962 = vmatpush.msra.mxu0 %v905
    %963 = vmatpush.msra.mxu0 %v902
    %964 = vmatmul.f32.gmra.mxu0 %v942
    %v965 = vpop.f32.mrf.mxu0
    %v966 = vadd.f32 0.0, %v965
    %967 = vdwg.mxu0
    %v968 = vmul.f32 %v902, %v902
    %v969 = vmul.f32 %v905, %v905
    %v970 = vmul.f32 %v908, %v908
    %v971 = vmul.f32 %v911, %v911
    %v972 = vmul.f32 %v914, %v914
    %v973 = vmul.f32 %v917, %v917
    %v974 = vmul.f32 %v920, %v920
    %v975 = vmul.f32 %v923, %v923
    %v976 = vmul.f32 %v926, %v926
    %v977 = vmul.f32 %v929, %v929
    %v978 = vmul.f32 %v932, %v932
    %v979 = vmul.f32 %v935, %v935
    %v980 = vmul.f32 %v938, %v938
    %v982 = vsel %vm944, %v980, 0
    %984 = vmatpush.msra.mxu0 0.0
    %985 = vmatpush.msra.mxu0 0.0
    %986 = vmatpush.msra.mxu0 0.0
    %987 = vmatpush.msra.mxu0 %v982
    %988 = vmatpush.msra.mxu0 %v979
    %989 = vmatpush.msra.mxu0 %v978
    %990 = vmatpush.msra.mxu0 %v977
    %991 = vmatpush.msra.mxu0 %v976
    %992 = vmatpush.msra.mxu0 %v975
    %993 = vmatpush.msra.mxu0 %v974
    %994 = vmatpush.msra.mxu0 %v973
    %995 = vmatpush.msra.mxu0 %v972
    %996 = vmatpush.msra.mxu0 %v971
    %997 = vmatpush.msra.mxu0 %v970
    %998 = vmatpush.msra.mxu0 %v969
    %999 = vmatpush.msra.mxu0 %v968
    %1000 = vmatmul.f32.gmra.mxu0 %v942
    %v1001 = vpop.f32.mrf.mxu0
    %v1002 = vadd.f32 0.0, %v1001
    %1003 = vdwg.mxu0
    %v1004 = vmul.f32 %v966, %v966
    %v1005 = vsub.f32 %v1002, %v1004
    %v1006 = vmax.f32 %v1005, 0.0
    %v1007 = vld [vmem:[%s8] sm:$0x1]
    %v1008 = vadd.f32 %v1006, 1e-05
    %v1009 = vrsqrt.pop %v1008
    %v1010 = vmul.f32 %v1009, %v1008
    %v1011 = vmul.f32 %v1010, %v1009
    %v1012 = vmul.f32 0.5, %v1011
    %v1013 = vsub.f32 1.5, %v1012
    %v1014 = vmul.f32 %v1009, %v1013
    %vm1015 = vweird.f32 %v1008
    %vm1016 = vweird.f32 %v1009
    %vm1017 = vmor %vm1015, %vm1016
    %v1018 = vsel %vm1017, %v1009, %v1014
    %v1019 = vmul.f32 %v1007, %v1018
    %v1020 = vld [vmem:[%s9] sm:$0x1]
    %v1021 = vmul.f32 %v966, %v1019
    %v1022 = vsub.f32 %v1020, %v1021
    %v1024 = vperm.slane %v1019, 0
    %v1026 = vmul.f32 %v902, %v1024
    %v1027 = vmul.f32 %v905, %v1024
    %v1028 = vmul.f32 %v908, %v1024
    %v1029 = vmul.f32 %v911, %v1024
    %v1030 = vmul.f32 %v914, %v1024
    %v1031 = vmul.f32 %v917, %v1024
    %v1032 = vmul.f32 %v920, %v1024
    %v1033 = vmul.f32 %v923, %v1024
    %v1034 = vmul.f32 %v926, %v1024
    %v1035 = vmul.f32 %v929, %v1024
    %v1036 = vmul.f32 %v932, %v1024
    %v1037 = vmul.f32 %v935, %v1024
    %v1038 = vmul.f32 %v938, %v1024
    %v1040 = vperm.slane %v1022, 0
    %v1042 = vadd.f32 %v1026, %v1040
    %v1043 = vadd.f32 %v1027, %v1040
    %v1044 = vadd.f32 %v1028, %v1040
    %v1045 = vadd.f32 %v1029, %v1040
    %v1046 = vadd.f32 %v1030, %v1040
    %v1047 = vadd.f32 %v1031, %v1040
    %v1048 = vadd.f32 %v1032, %v1040
    %v1049 = vadd.f32 %v1033, %v1040
    %v1050 = vadd.f32 %v1034, %v1040
    %v1051 = vadd.f32 %v1035, %v1040
    %v1052 = vadd.f32 %v1036, %v1040
    %v1053 = vadd.f32 %v1037, %v1040
    %v1054 = vadd.f32 %v1038, %v1040
    %v1055 = vmul.f32 %v1042, %v1042
    %v1056 = vmul.f32 %v1043, %v1043
    %v1057 = vmul.f32 %v1044, %v1044
    %v1058 = vmul.f32 %v1045, %v1045
    %v1059 = vmul.f32 %v1046, %v1046
    %v1060 = vmul.f32 %v1047, %v1047
    %v1061 = vmul.f32 %v1048, %v1048
    %v1062 = vmul.f32 %v1049, %v1049
    %v1063 = vmul.f32 %v1050, %v1050
    %v1064 = vmul.f32 %v1051, %v1051
    %v1065 = vmul.f32 %v1052, %v1052
    %v1066 = vmul.f32 %v1053, %v1053
    %v1067 = vmul.f32 %v1054, %v1054
    %v1068 = vsel %vm36, %v1055, 0.0
    %1069 = vadd.xlane.f32.xlu0 %v1068
    %v1070 = vpop.xlane.xlu0 %1069
    %v1071 = vsel %vm36, %v1056, 0.0
    %1072 = vadd.xlane.f32.xlu0 %v1071
    %v1073 = vpop.xlane.xlu0 %1072
    %v1074 = vsel %vm36, %v1057, 0.0
    %1075 = vadd.xlane.f32.xlu0 %v1074
    %v1076 = vpop.xlane.xlu0 %1075
    %v1077 = vsel %vm36, %v1058, 0.0
    %1078 = vadd.xlane.f32.xlu0 %v1077
    %v1079 = vpop.xlane.xlu0 %1078
    %v1080 = vsel %vm36, %v1059, 0.0
    %1081 = vadd.xlane.f32.xlu0 %v1080
    %v1082 = vpop.xlane.xlu0 %1081
    %v1083 = vsel %vm36, %v1060, 0.0
    %1084 = vadd.xlane.f32.xlu0 %v1083
    %v1085 = vpop.xlane.xlu0 %1084
    %v1086 = vsel %vm36, %v1061, 0.0
    %1087 = vadd.xlane.f32.xlu0 %v1086
    %v1088 = vpop.xlane.xlu0 %1087
    %v1089 = vsel %vm36, %v1062, 0.0
    %1090 = vadd.xlane.f32.xlu0 %v1089
    %v1091 = vpop.xlane.xlu0 %1090
    %v1092 = vsel %vm36, %v1063, 0.0
    %1093 = vadd.xlane.f32.xlu0 %v1092
    %v1094 = vpop.xlane.xlu0 %1093
    %v1095 = vsel %vm36, %v1064, 0.0
    %1096 = vadd.xlane.f32.xlu0 %v1095
    %v1097 = vpop.xlane.xlu0 %1096
    %v1098 = vsel %vm36, %v1065, 0.0
    %1099 = vadd.xlane.f32.xlu0 %v1098
    %v1100 = vpop.xlane.xlu0 %1099
    %v1101 = vsel %vm36, %v1066, 0.0
    %1102 = vadd.xlane.f32.xlu0 %v1101
    %v1103 = vpop.xlane.xlu0 %1102
    %vm1104 = vcmask 259072
    %v1105 = vsel %vm1104, %v1067, 0.0
    %1106 = vadd.xlane.f32.xlu0 %v1105
    %v1107 = vpop.xlane.xlu0 %1106
    %v1108 = vmax.f32 %v1070, 1e-24
    %v1109 = vmax.f32 %v1073, 1e-24
    %v1110 = vmax.f32 %v1076, 1e-24
    %v1111 = vmax.f32 %v1079, 1e-24
    %v1112 = vmax.f32 %v1082, 1e-24
    %v1113 = vmax.f32 %v1085, 1e-24
    %v1114 = vmax.f32 %v1088, 1e-24
    %v1115 = vmax.f32 %v1091, 1e-24
    %v1116 = vmax.f32 %v1094, 1e-24
    %v1117 = vmax.f32 %v1097, 1e-24
    %v1118 = vmax.f32 %v1100, 1e-24
    %v1119 = vmax.f32 %v1103, 1e-24
    %v1120 = vmax.f32 %v1107, 1e-24
    %v1121 = vrsqrt.pop %v1108
    %v1122 = vmul.f32 %v1121, %v1108
    %v1123 = vmul.f32 %v1122, %v1121
    %v1124 = vmul.f32 0.5, %v1123
    %v1125 = vsub.f32 1.5, %v1124
    %v1126 = vmul.f32 %v1121, %v1125
    %vm1127 = vweird.f32 %v1108
    %vm1128 = vweird.f32 %v1121
    %vm1129 = vmor %vm1127, %vm1128
    %v1130 = vsel %vm1129, %v1121, %v1126
    %v1131 = vrsqrt.pop %v1109
    %v1132 = vmul.f32 %v1131, %v1109
    %v1133 = vmul.f32 %v1132, %v1131
    %v1134 = vmul.f32 0.5, %v1133
    %v1135 = vsub.f32 1.5, %v1134
    %v1136 = vmul.f32 %v1131, %v1135
    %vm1137 = vweird.f32 %v1109
    %vm1138 = vweird.f32 %v1131
    %vm1139 = vmor %vm1137, %vm1138
    %v1140 = vsel %vm1139, %v1131, %v1136
    %v1141 = vrsqrt.pop %v1110
    %v1142 = vmul.f32 %v1141, %v1110
    %v1143 = vmul.f32 %v1142, %v1141
    %v1144 = vmul.f32 0.5, %v1143
    %v1145 = vsub.f32 1.5, %v1144
    %v1146 = vmul.f32 %v1141, %v1145
    %vm1147 = vweird.f32 %v1110
    %vm1148 = vweird.f32 %v1141
    %vm1149 = vmor %vm1147, %vm1148
    %v1150 = vsel %vm1149, %v1141, %v1146
    %v1151 = vrsqrt.pop %v1111
    %v1152 = vmul.f32 %v1151, %v1111
    %v1153 = vmul.f32 %v1152, %v1151
    %v1154 = vmul.f32 0.5, %v1153
    %v1155 = vsub.f32 1.5, %v1154
    %v1156 = vmul.f32 %v1151, %v1155
    %vm1157 = vweird.f32 %v1111
    %vm1158 = vweird.f32 %v1151
    %vm1159 = vmor %vm1157, %vm1158
    %v1160 = vsel %vm1159, %v1151, %v1156
    %v1161 = vrsqrt.pop %v1112
    %v1162 = vmul.f32 %v1161, %v1112
    %v1163 = vmul.f32 %v1162, %v1161
    %v1164 = vmul.f32 0.5, %v1163
    %v1165 = vsub.f32 1.5, %v1164
    %v1166 = vmul.f32 %v1161, %v1165
    %vm1167 = vweird.f32 %v1112
    %vm1168 = vweird.f32 %v1161
    %vm1169 = vmor %vm1167, %vm1168
    %v1170 = vsel %vm1169, %v1161, %v1166
    %v1171 = vrsqrt.pop %v1113
    %v1172 = vmul.f32 %v1171, %v1113
    %v1173 = vmul.f32 %v1172, %v1171
    %v1174 = vmul.f32 0.5, %v1173
    %v1175 = vsub.f32 1.5, %v1174
    %v1176 = vmul.f32 %v1171, %v1175
    %vm1177 = vweird.f32 %v1113
    %vm1178 = vweird.f32 %v1171
    %vm1179 = vmor %vm1177, %vm1178
    %v1180 = vsel %vm1179, %v1171, %v1176
    %v1181 = vrsqrt.pop %v1114
    %v1182 = vmul.f32 %v1181, %v1114
    %v1183 = vmul.f32 %v1182, %v1181
    %v1184 = vmul.f32 0.5, %v1183
    %v1185 = vsub.f32 1.5, %v1184
    %v1186 = vmul.f32 %v1181, %v1185
    %vm1187 = vweird.f32 %v1114
    %vm1188 = vweird.f32 %v1181
    %vm1189 = vmor %vm1187, %vm1188
    %v1190 = vsel %vm1189, %v1181, %v1186
    %v1191 = vrsqrt.pop %v1115
    %v1192 = vmul.f32 %v1191, %v1115
    %v1193 = vmul.f32 %v1192, %v1191
    %v1194 = vmul.f32 0.5, %v1193
    %v1195 = vsub.f32 1.5, %v1194
    %v1196 = vmul.f32 %v1191, %v1195
    %vm1197 = vweird.f32 %v1115
    %vm1198 = vweird.f32 %v1191
    %vm1199 = vmor %vm1197, %vm1198
    %v1200 = vsel %vm1199, %v1191, %v1196
    %v1201 = vrsqrt.pop %v1116
    %v1202 = vmul.f32 %v1201, %v1116
    %v1203 = vmul.f32 %v1202, %v1201
    %v1204 = vmul.f32 0.5, %v1203
    %v1205 = vsub.f32 1.5, %v1204
    %v1206 = vmul.f32 %v1201, %v1205
    %vm1207 = vweird.f32 %v1116
    %vm1208 = vweird.f32 %v1201
    %vm1209 = vmor %vm1207, %vm1208
    %v1210 = vsel %vm1209, %v1201, %v1206
    %v1211 = vrsqrt.pop %v1117
    %v1212 = vmul.f32 %v1211, %v1117
    %v1213 = vmul.f32 %v1212, %v1211
    %v1214 = vmul.f32 0.5, %v1213
    %v1215 = vsub.f32 1.5, %v1214
    %v1216 = vmul.f32 %v1211, %v1215
    %vm1217 = vweird.f32 %v1117
    %vm1218 = vweird.f32 %v1211
    %vm1219 = vmor %vm1217, %vm1218
    %v1220 = vsel %vm1219, %v1211, %v1216
    %v1221 = vrsqrt.pop %v1118
    %v1222 = vmul.f32 %v1221, %v1118
    %v1223 = vmul.f32 %v1222, %v1221
    %v1224 = vmul.f32 0.5, %v1223
    %v1225 = vsub.f32 1.5, %v1224
    %v1226 = vmul.f32 %v1221, %v1225
    %vm1227 = vweird.f32 %v1118
    %vm1228 = vweird.f32 %v1221
    %vm1229 = vmor %vm1227, %vm1228
    %v1230 = vsel %vm1229, %v1221, %v1226
    %v1231 = vrsqrt.pop %v1119
    %v1232 = vmul.f32 %v1231, %v1119
    %v1233 = vmul.f32 %v1232, %v1231
    %v1234 = vmul.f32 0.5, %v1233
    %v1235 = vsub.f32 1.5, %v1234
    %v1236 = vmul.f32 %v1231, %v1235
    %vm1237 = vweird.f32 %v1119
    %vm1238 = vweird.f32 %v1231
    %vm1239 = vmor %vm1237, %vm1238
    %v1240 = vsel %vm1239, %v1231, %v1236
    %v1241 = vrsqrt.pop %v1120
    %v1242 = vmul.f32 %v1241, %v1120
    %v1243 = vmul.f32 %v1242, %v1241
    %v1244 = vmul.f32 0.5, %v1243
    %v1245 = vsub.f32 1.5, %v1244
    %v1246 = vmul.f32 %v1241, %v1245
    %vm1247 = vweird.f32 %v1120
    %vm1248 = vweird.f32 %v1241
    %vm1249 = vmor %vm1247, %vm1248
    %v1250 = vsel %vm1249, %v1241, %v1246
    %v1251 = vmul.f32 %v1042, %v1130
    %v1252 = vmul.f32 %v1043, %v1140
    %v1253 = vmul.f32 %v1044, %v1150
    %v1254 = vmul.f32 %v1045, %v1160
    %v1255 = vmul.f32 %v1046, %v1170
    %v1256 = vmul.f32 %v1047, %v1180
    %v1257 = vmul.f32 %v1048, %v1190
    %v1258 = vmul.f32 %v1049, %v1200
    %v1259 = vmul.f32 %v1050, %v1210
    %v1260 = vmul.f32 %v1051, %v1220
    %v1261 = vmul.f32 %v1052, %v1230
    %v1262 = vmul.f32 %v1053, %v1240
    %v1263 = vmul.f32 %v1054, %v1250
    %1264 = vxpose.xlu0.b32.start [1/16] %v1251, 128
    %1265 = vxpose.xlu0.b32.cont [2/16] %v1252, 128
    %1266 = vxpose.xlu0.b32.cont [3/16] %v1253, 128
    %1267 = vxpose.xlu0.b32.cont [4/16] %v1254, 128
    %1268 = vxpose.xlu0.b32.cont [5/16] %v1255, 128
    %1269 = vxpose.xlu0.b32.cont [6/16] %v1256, 128
    %1270 = vxpose.xlu0.b32.cont [7/16] %v1257, 128
    %1271 = vxpose.xlu0.b32.cont [8/16] 0.0, 128
    %1272 = vxpose.xlu0.b32.cont [9/16] 0.0, 128
    %1273 = vxpose.xlu0.b32.cont [10/16] 0.0, 128
    %1274 = vxpose.xlu0.b32.cont [11/16] 0.0, 128
    %1275 = vxpose.xlu0.b32.cont [12/16] 0.0, 128
    %1276 = vxpose.xlu0.b32.cont [13/16] 0.0, 128
    %1277 = vxpose.xlu0.b32.cont [14/16] 0.0, 128
    %1278 = vxpose.xlu0.b32.cont [15/16] 0.0, 128
    %1279 = vxpose.xlu0.b32.end [16/16] 0.0, 128
    %v1280 = vpop.trf.xlu0
    %v1281 = vpop.trf.xlu0
    %v1282 = vpop.trf.xlu0
    %v1283 = vpop.trf.xlu0
    %v1284 = vpop.trf.xlu0
    %v1285 = vpop.trf.xlu0
    %v1286 = vpop.trf.xlu0
    %v1287 = vpop.trf.xlu0
    %v1288 = vpop.trf.xlu0
    %v1289 = vpop.trf.xlu0
    %v1290 = vpop.trf.xlu0
    %v1291 = vpop.trf.xlu0
    %v1292 = vpop.trf.xlu0
    %v1293 = vpop.trf.xlu0
    %v1294 = vpop.trf.xlu0
    %v1295 = vpop.trf.xlu0
    %vm1296 = vcmask 416768
    %1297 = vst.msk [vmem:[#allocation5] sm:$0xff] %vm1296, %v1280
    %1298 = vst.msk [vmem:[#allocation5 + $0x8] sm:$0xff] %vm1296, %v1281
    %1299 = vst.msk [vmem:[#allocation5 + $0x10] sm:$0xff] %vm1296, %v1282
    %1300 = vst.msk [vmem:[#allocation5 + $0x18] sm:$0xff] %vm1296, %v1283
    %vm1308 = vcmask 1044480
    %v1309 = vrot.slane %v1257, 3
    %v1310 = vrot.slane %v1258, 3
    %v1311 = vsel %vm1308, %v1309, %v1310
    %v1312 = vrot.slane %v1259, 3
    %v1313 = vsel %vm1308, %v1310, %v1312
    %v1314 = vrot.slane %v1260, 3
    %v1315 = vsel %vm1308, %v1312, %v1314
    %v1316 = vrot.slane %v1261, 3
    %v1317 = vsel %vm1308, %v1314, %v1316
    %v1318 = vrot.slane %v1262, 3
    %v1319 = vsel %vm1308, %v1316, %v1318
    %v1320 = vrot.slane %v1263, 3
    %v1321 = vsel %vm1308, %v1318, %v1320
    %1329 = vxpose.xlu0.b32.start [1/16] %v1311, 128
    %1330 = vxpose.xlu0.b32.cont [2/16] %v1313, 128
    %1331 = vxpose.xlu0.b32.cont [3/16] %v1315, 128
    %1332 = vxpose.xlu0.b32.cont [4/16] %v1317, 128
    %1333 = vxpose.xlu0.b32.cont [5/16] %v1319, 128
    %1334 = vxpose.xlu0.b32.cont [6/16] %v1321, 128
    %1335 = vxpose.xlu0.b32.cont [7/16] %v1320, 128
    %1336 = vxpose.xlu0.b32.cont [8/16] 0.0, 128
    %1337 = vxpose.xlu0.b32.cont [9/16] 0.0, 128
    %1338 = vxpose.xlu0.b32.cont [10/16] 0.0, 128
    %1339 = vxpose.xlu0.b32.cont [11/16] 0.0, 128
    %1340 = vxpose.xlu0.b32.cont [12/16] 0.0, 128
    %1341 = vxpose.xlu0.b32.cont [13/16] 0.0, 128
    %1342 = vxpose.xlu0.b32.cont [14/16] 0.0, 128
    %1343 = vxpose.xlu0.b32.cont [15/16] 0.0, 128
    %1344 = vxpose.xlu0.b32.end [16/16] 0.0, 128
    %v1345 = vpop.trf.xlu0
    %v1346 = vpop.trf.xlu0
    %v1347 = vpop.trf.xlu0
    %v1348 = vpop.trf.xlu0
    %v1349 = vpop.trf.xlu0
    %v1350 = vpop.trf.xlu0
    %v1351 = vpop.trf.xlu0
    %v1352 = vpop.trf.xlu0
    %v1353 = vpop.trf.xlu0
    %v1354 = vpop.trf.xlu0
    %v1355 = vpop.trf.xlu0
    %v1356 = vpop.trf.xlu0
    %v1357 = vpop.trf.xlu0
    %v1358 = vpop.trf.xlu0
    %v1359 = vpop.trf.xlu0
    %v1360 = vpop.trf.xlu0
    %s1361 = scalar_lea.vmem [#allocation5], 32
    %1362 = vst.msk [vmem:[%s1361] sm:$0xff] %vm1296, %v1345
    %1363 = vst.msk [vmem:[%s1361 + $0x8] sm:$0xff] %vm1296, %v1346
    %1364 = vst.msk [vmem:[%s1361 + $0x10] sm:$0xff] %vm1296, %v1347
    %1365 = vst.msk [vmem:[%s1361 + $0x18] sm:$0xff] %vm1296, %v1348
    // Predicated region
    $region42: #{_decoder_forward_impl.1} parent=1 // pred_check
      _
    $region43: #{_decoder_forward_impl.1} parent=1 // pred_check_branch
      %1367 = sbr.rel (0) target = $region45
    $region44: #{_decoder_forward_impl.1} parent=1 // pred_region
      %1369 = vsyncadd [#allocation6], 0
      %s1370 = sshll.u32 [#allocation5], 4
      %s1371 = int_to_ptr.vmem [resolvable:$true] %s1370
      %s1372 = sshll.u32 %s10, 4
      %s1373 = int_to_ptr.hbm [resolvable:$true] %s1372
      %1378 = dma.vmem_to_hbm [thread:$0]  %s1371, 1024, %s1373, [#allocation6], 128, 128, 8
    $region45: #{_decoder_forward_impl.1} parent=1 // pred_fallthru
      _
    // Predicated region
    $region46: #{_decoder_forward_impl.1} parent=1 // pred_check
      _
    $region47: #{_decoder_forward_impl.1} parent=1 // pred_check_branch
      %1380 = sbr.rel (0) target = $region49
    $region48: #{_decoder_forward_impl.1} parent=1 // pred_region
      %1382 = dma.done [#allocation6], 1024
    $region49: #{_decoder_forward_impl.1} parent=1 // pred_fallthru
      _
    %1383 = vsyncpa [#allocation6], 1

</llo_original>
